<compile_context>
chip_gen: v7x
topology: tpu7x:2x2x1
jax: 0.10.0
libtpu: 0.0.40
codegen_flags: <defaults>
</compile_context>

<pallas_src>
import jax
import jax.numpy as jnp
import numpy as np
from jax.experimental import pallas as pl
from jax.experimental.pallas import tpu as pltpu

_LANES = 128
_SUBLANES = 8


def _round_up(value, multiple):
    return ((value + multiple - 1) // multiple) * multiple


def _pad2d(a, rows, cols):
    return jnp.pad(a, ((0, rows - a.shape[0]), (0, cols - a.shape[1])))


def _vmem_budget_bytes():
    """Generation-aware (budget, vmem_limit) pair.  128 MiB chips (v5e/v6e)
    plan for ~80 MiB and request ~100 MiB; 64 MiB chips (v7x) ~40/50 MiB."""
    cap = None
    try:
        info = pltpu.get_tpu_info()
        cap = getattr(info, "vmem_capacity_bytes", None)
    except Exception:
        cap = None
    if not cap:
        cap = 64 * 1024 * 1024  # conservative: assume v7x-sized VMEM
    budget = (cap * 5) // 8
    limit = min(cap - 8 * 1024 * 1024, (cap * 25) // 32)
    limit = max(limit, budget + 4 * 1024 * 1024)
    return int(budget), int(limit)


# --------------------------------------------------------------------------
# Kernel
# --------------------------------------------------------------------------
def base_block_kernel(x_ref, w0_ref, b0_ref, w1_ref, b1_ref, wo_ref, bo_ref,
                      h0_ref, h1_ref, y_ref, acc_ref):
    """Fused pool(+flatten)->Linear->ReLU->Linear->ReLU->Linear.

    Grid axis 0: batch tiles ("parallel").  Grid axis 1: layer_0 contraction
    tiles over K = C*H*W ("arbitrary", f32 accumulator in scratch).
    """
    k = pl.program_id(1)
    mxu_dtype = w0_ref.dtype

    @pl.when(k == 0)
    def _init():
        acc_ref[...] = jnp.zeros_like(acc_ref)

    # layer_0 partial matmul: AdaptiveAvgPool2d((1,1)) + Flatten + Linear are
    # folded into one MXU contraction (w0 carries the 1/(H*W) scale expanded
    # over the spatial dim), so the pooling reduction rides the MXU for free.
    x = x_ref[...]
    if x.dtype != mxu_dtype:
        x = x.astype(mxu_dtype)  # in-VMEM cast only when producer dtype differs
    acc_ref[...] += jnp.dot(x, w0_ref[...], preferred_element_type=jnp.float32)

    @pl.when(k == pl.num_programs(1) - 1)
    def _finalize():
        # bias + ReLU in f32; all stores are lane-dense (128-multiple widths).
        h0 = jnp.maximum(acc_ref[...] + b0_ref[...], 0.0)
        h0_ref[...] = h0.astype(h0_ref.dtype)

        h1 = jnp.dot(h0.astype(mxu_dtype), w1_ref[...],
                     preferred_element_type=jnp.float32)
        h1 = jnp.maximum(h1 + b1_ref[...], 0.0)
        h1_ref[...] = h1.astype(h1_ref.dtype)

        y = jnp.dot(h1.astype(mxu_dtype), wo_ref[...],
                    preferred_element_type=jnp.float32) + bo_ref[...]
        y_ref[...] = y.astype(y_ref.dtype)


# --------------------------------------------------------------------------
# Wrapper
# --------------------------------------------------------------------------
def prepare_params(params, input_dims, *, mxu_dtype=jnp.bfloat16):
    """One-time weight prep (hoisted out of the forward path, cache & reuse):
    fold the average-pool into w0, zero-pad widths to lane multiples, cast
    MXU operands."""
    w0, b0, w1, b1, wo, bo = params
    C, H, W = input_dims
    HW = H * W
    K = C * HW
    H0, H1, NOUT = w0.shape[1], w1.shape[1], wo.shape[1]
    H0P, H1P, NOUTP = (_round_up(d, _LANES) for d in (H0, H1, NOUT))

    # mean_hw(x) @ w0 == x_flat @ w0_exp with w0_exp[c*HW + s, :] = w0[c, :]/HW
    w0e = jnp.repeat(w0 * (1.0 / HW), HW, axis=0)  # (K, H0)
    return dict(
        w0p=_pad2d(w0e, K, H0P).astype(mxu_dtype),
        w1p=_pad2d(w1, H0P, H1P).astype(mxu_dtype),
        wop=_pad2d(wo, H1P, NOUTP).astype(mxu_dtype),
        b0p=_pad2d(b0.reshape(1, -1), 1, H0P).astype(jnp.float32),
        b1p=_pad2d(b1.reshape(1, -1), 1, H1P).astype(jnp.float32),
        bop=_pad2d(bo.reshape(1, -1), 1, NOUTP).astype(jnp.float32),
        K=K, HW=HW, H0=H0, H1=H1, NOUT=NOUT,
        H0P=H0P, H1P=H1P, NOUTP=NOUTP,
        mxu_dtype=jnp.dtype(mxu_dtype),
    )


def _choose_tiles(n, k, h0p, out_cols, resident_bytes, x_item, out_item,
                  w_item, budget):
    """Pick (batch_tile, k_tile) so double-buffered x/out blocks + resident
    weights + the layer_0 accumulator fit the generation-aware budget."""
    def tn_for(tk, w0_bufs):
        fixed = resident_bytes + w0_bufs * tk * h0p * w_item
        avail = budget - fixed
        if avail <= 0:
            return 0
        per_row = (2 * tk * x_item          # x block, double-buffered
                   + 2 * out_cols * out_item  # h0/h1/y blocks, double-buffered
                   + h0p * 4)                 # f32 accumulator scratch
        return (avail // per_row) // _SUBLANES * _SUBLANES

    tn = tn_for(k, 1)
    tk = k
    if tn < min(128, _round_up(max(n, 1), _SUBLANES)):
        # layer_0 contraction too fat for VMEM: tile K (multiples of 128 only
        # so every x block stays lane-dense / unmasked).
        for cand in (4096, 2048, 1024, 512, 256, 128):
            if cand < k and k % cand == 0:
                tk = cand
                break
        tn = tn_for(tk, 2)
    tn = max(_SUBLANES, min(tn, 512))
    return tn, tk


def base_block_forward(x_nchw, prepared, *, out_dtype=jnp.float32,
                       batch_tile=None, k_tile=None):
    """Returns (y_hat, [layer_0_out, layer_1_out]) like BaseBlock.forward."""
    N, C, H, W = x_nchw.shape
    K, HW = prepared["K"], prepared["HW"]
    assert C * H * W == K and H * W == HW, "input_dims mismatch with prepared params"
    H0, H1, NOUT = prepared["H0"], prepared["H1"], prepared["NOUT"]
    H0P, H1P, NOUTP = prepared["H0P"], prepared["H1P"], prepared["NOUTP"]
    w0p, b0p = prepared["w0p"], prepared["b0p"]
    w1p, b1p = prepared["w1p"], prepared["b1p"]
    wop, bop = prepared["wop"], prepared["bop"]
    mxu_dtype = prepared["mxu_dtype"]

    # (N, C, H, W) -> (N, C*H*W): contiguous reshape, NO dtype cast here.
    # x streams through HBM in whatever dtype the producer emitted.
    x2d = x_nchw.reshape(N, K)

    x_item = jnp.dtype(x2d.dtype).itemsize
    out_item = jnp.dtype(out_dtype).itemsize
    w_item = jnp.dtype(mxu_dtype).itemsize
    resident_bytes = ((w1p.size + wop.size) * w_item
                      + (b0p.size + b1p.size + bop.size) * 4)
    out_cols = H0P + H1P + NOUTP

    budget, vmem_limit = _vmem_budget_bytes()
    tn, tk = _choose_tiles(N, K, H0P, out_cols, resident_bytes,
                           x_item, out_item, w_item, budget)
    if batch_tile is None:
        if N <= _SUBLANES:
            tn = N  # single full-batch block (block dim == array dim is legal)
        else:
            tn = min(tn, _round_up(N, _SUBLANES))
            # >= 2 batch steps so v7x's two TensorCores both pull on HBM.
            tn = min(tn, _round_up(-(-N // 2), _SUBLANES))
            tn = max(tn, _SUBLANES)
    else:
        tn = batch_tile
        assert tn == N or tn % _SUBLANES == 0, \
            "batch_tile must equal N or be a multiple of 8"
    if k_tile is not None:
        tk = k_tile
    assert K % tk == 0, "k_tile must divide C*H*W"
    num_batch_tiles = -(-N // tn)
    num_k_tiles = K // tk

    out_shapes = (
        jax.ShapeDtypeStruct((N, H0P), out_dtype),
        jax.ShapeDtypeStruct((N, H1P), out_dtype),
        jax.ShapeDtypeStruct((N, NOUTP), out_dtype),
    )

    def build_and_call(single_buffer_weights):
        def resident(shape):
            # Constant block index -> stays in VMEM across the whole grid;
            # a single buffer is enough (the 2nd one is never filled again).
            if single_buffer_weights:
                return pl.BlockSpec(shape, lambda i, k: (0, 0),
                                    pipeline_mode=pl.Buffered(1))
            return pl.BlockSpec(shape, lambda i, k: (0, 0))

        if num_k_tiles == 1:
            w0_spec = resident(w0p.shape)
        else:
            w0_spec = pl.BlockSpec((tk, H0P), lambda i, k: (k, 0))

        in_specs = [
            pl.BlockSpec((tn, tk), lambda i, k: (i, k)),
            w0_spec, resident(b0p.shape),
            resident(w1p.shape), resident(b1p.shape),
            resident(wop.shape), resident(bop.shape),
        ]
        out_specs = [
            pl.BlockSpec((tn, H0P), lambda i, k: (i, 0)),
            pl.BlockSpec((tn, H1P), lambda i, k: (i, 0)),
            pl.BlockSpec((tn, NOUTP), lambda i, k: (i, 0)),
        ]
        return pl.pallas_call(
            base_block_kernel,
            out_shape=out_shapes,
            grid_spec=pltpu.PrefetchScalarGridSpec(
                num_scalar_prefetch=0,
                grid=(num_batch_tiles, num_k_tiles),
                in_specs=in_specs,
                out_specs=out_specs,
                scratch_shapes=[pltpu.VMEM((tn, H0P), jnp.float32)],
            ),
            compiler_params=pltpu.CompilerParams(
                dimension_semantics=("parallel", "arbitrary"),
                vmem_limit_bytes=vmem_limit,
            ),
        )(x2d, w0p, b0p, w1p, b1p, wop, bop)

    try:
        h0p_, h1p_, yp_ = build_and_call(True)
    except Exception:
        # pipeline_mode=pl.Buffered(1) unsupported on this build: fall back to
        # default double-buffered resident weights (same semantics).
        h0p_, h1p_, yp_ = build_and_call(False)

    # Slice the lane padding back off (kernel stores stay lane-dense).
    return yp_[:, :NOUT], [h0p_[:, :H0], h1p_[:, :H1]]


# --------------------------------------------------------------------------
# Reference + demo
# --------------------------------------------------------------------------
def make_params(key, c_in, h0, h1, num_outputs):
    """Deterministic synthetic parameter init (Kaiming-uniform-ish scaling)."""
    ks = jax.random.split(key, 6)

    def lin(kw, kb, fan_in, fan_out):
        bound = 1.0 / np.sqrt(fan_in)
        w = jax.random.uniform(kw, (fan_in, fan_out), jnp.float32, -bound, bound)
        b = jax.random.uniform(kb, (1, fan_out), jnp.float32, -bound, bound)
        return w, b

    w0, b0 = lin(ks[0], ks[1], c_in, h0)
    w1, b1 = lin(ks[2], ks[3], h0, h1)
    wo, bo = lin(ks[4], ks[5], h1, num_outputs)
    return (w0, b0, w1, b1, wo, bo)


def reference_forward(x_nchw, params):
    """Plain-JAX f32 reference for correctness checking."""
    w0, b0, w1, b1, wo, bo = params
    pooled = jnp.mean(x_nchw, axis=(2, 3))  # AdaptiveAvgPool2d((1,1)) + Flatten
    h0 = jnp.maximum(pooled @ w0 + b0, 0.0)
    h1 = jnp.maximum(h0 @ w1 + b1, 0.0)
    y = h1 @ wo + bo
    return y, [h0, h1]


def _check(got, want, rtol, atol):
    np.testing.assert_allclose(np.asarray(got, dtype=np.float32),
                               np.asarray(want, dtype=np.float32),
                               rtol=rtol, atol=atol)


if __name__ == "__main__":
    N, C, H, W = 2, 4, 16, 16
    H0, H1, NUM_OUTPUTS = 32, 32, 10

    key = jax.random.PRNGKey(0)
    kx, kp, kx2 = jax.random.split(key, 3)
    x = jax.random.normal(kx, (N, C, H, W), jnp.float32)
    params = make_params(kp, C, H0, H1, NUM_OUTPUTS)

    # Weight prep is hoisted out of the forward path and reused across calls.
    prepared_f32 = prepare_params(params, (C, H, W), mxu_dtype=jnp.float32)
    prepared_bf16 = prepare_params(params, (C, H, W), mxu_dtype=jnp.bfloat16)

    # 1) f32 MXU path — semantics check against the f32 reference.
    y_ref, layers_ref = reference_forward(x, params)
    y_f32, layers_f32 = base_block_forward(x, prepared_f32)
    jax.block_until_ready(y_f32)
    jax.block_until_ready(layers_f32)
    _check(y_f32, y_ref, rtol=1e-3, atol=1e-4)
    for got, want in zip(layers_f32, layers_ref):
        _check(got, want, rtol=1e-3, atol=1e-4)

    # 2) bf16 producer path: x stored/streamed as bf16 (no wrapper cast),
    #    bf16 MXU operands, bf16 output stores. f32 accumulate/bias/ReLU.
    x_bf = x.astype(jnp.bfloat16)                       # "producer emits bf16"
    y_ref_bf, layers_ref_bf = reference_forward(x_bf.astype(jnp.float32), params)
    y_bf, layers_bf = base_block_forward(x_bf, prepared_bf16,
                                         out_dtype=jnp.bfloat16)
    jax.block_until_ready(y_bf)
    jax.block_until_ready(layers_bf)
    _check(y_bf, y_ref_bf, rtol=5e-2, atol=3e-2)
    for got, want in zip(layers_bf, layers_ref_bf):
        _check(got, want, rtol=5e-2, atol=3e-2)

    # 3) Multi-tile grid path: batch tiled (grid axis 0) AND layer_0
    #    contraction tiled over K (grid axis 1, accumulator + pl.when).
    xb = jax.random.normal(kx2, (48, C, H, W), jnp.float32)
    yb_ref, layersb_ref = reference_forward(xb, params)
    y_b, layers_b = base_block_forward(xb, prepared_f32,
                                       batch_tile=16, k_tile=256)
    jax.block_until_ready(y_b)
    jax.block_until_ready(layers_b)
    _check(y_b, yb_ref, rtol=1e-3, atol=1e-4)
    for got, want in zip(layers_b, layersb_ref):
        _check(got, want, rtol=1e-3, atol=1e-4)

    print("KERNEL_OK")
</pallas_src>

<mosaic_0001>
module attributes {stable_mosaic.version = 11 : i64} {
  func.func @base_block_kernel(%arg0: i32, %arg1: i32, %arg2: memref<2x1024xf32, #tpu.memory_space<vmem>>, %arg3: memref<1024x128xf32, #tpu.memory_space<vmem>>, %arg4: memref<1x128xf32, #tpu.memory_space<vmem>>, %arg5: memref<128x128xf32, #tpu.memory_space<vmem>>, %arg6: memref<1x128xf32, #tpu.memory_space<vmem>>, %arg7: memref<128x128xf32, #tpu.memory_space<vmem>>, %arg8: memref<1x128xf32, #tpu.memory_space<vmem>>, %arg9: memref<2x128xf32, #tpu.memory_space<vmem>>, %arg10: memref<2x128xf32, #tpu.memory_space<vmem>>, %arg11: memref<2x128xf32, #tpu.memory_space<vmem>>, %arg12: memref<2x128xf32, #tpu.memory_space<vmem>>) attributes {dimension_semantics = [#tpu.dimension_semantics<parallel>, #tpu.dimension_semantics<arbitrary>], iteration_bounds = array<i64: 1, 1>, scalar_prefetch = 0 : i64, scratch_operands = 1 : i64, tpu.core_type = #tpu.core_type<tc>, window_params = [{transform_indices = @transform_0, window_bounds = array<i64: 2, 1024>}, {pipeline_mode = #tpu.pipeline_mode<synchronous>, transform_indices = @transform_1, window_bounds = array<i64: 1024, 128>}, {pipeline_mode = #tpu.pipeline_mode<synchronous>, transform_indices = @transform_2, window_bounds = array<i64: 1, 128>}, {pipeline_mode = #tpu.pipeline_mode<synchronous>, transform_indices = @transform_3, window_bounds = array<i64: 128, 128>}, {pipeline_mode = #tpu.pipeline_mode<synchronous>, transform_indices = @transform_4, window_bounds = array<i64: 1, 128>}, {pipeline_mode = #tpu.pipeline_mode<synchronous>, transform_indices = @transform_5, window_bounds = array<i64: 128, 128>}, {pipeline_mode = #tpu.pipeline_mode<synchronous>, transform_indices = @transform_6, window_bounds = array<i64: 1, 128>}, {transform_indices = @transform_7, window_bounds = array<i64: 2, 128>}, {transform_indices = @transform_8, window_bounds = array<i64: 2, 128>}, {transform_indices = @transform_9, window_bounds = array<i64: 2, 128>}]} {
    %c0_i32 = arith.constant 0 : i32
    %0 = arith.cmpi eq, %arg1, %c0_i32 : i32
    %1 = arith.extui %0 : i1 to i32
    %c0_i32_0 = arith.constant 0 : i32
    %2 = arith.cmpi ne, %1, %c0_i32_0 : i32
    scf.if %2 {
      %cst_10 = arith.constant 0.000000e+00 : f32
      %12 = vector.broadcast %cst_10 : f32 to vector<2x128xf32>
      %c0_11 = arith.constant 0 : index
      %c0_12 = arith.constant 0 : index
      %13 = vector.load %arg12[%c0_11, %c0_12] : memref<2x128xf32, #tpu.memory_space<vmem>>, vector<2x128xf32>
      tpu.vector_store %arg12[%c0_11, %c0_12], %12 {strides = array<i32>} : memref<2x128xf32, #tpu.memory_space<vmem>>, vector<2x128xf32>,
    } else {
    }
    %c0 = arith.constant 0 : index
    %c0_1 = arith.constant 0 : index
    %3 = vector.load %arg2[%c0, %c0_1] : memref<2x1024xf32, #tpu.memory_space<vmem>>, vector<2x1024xf32>
    %c0_2 = arith.constant 0 : index
    %c0_3 = arith.constant 0 : index
    %4 = vector.load %arg12[%c0_2, %c0_3] : memref<2x128xf32, #tpu.memory_space<vmem>>, vector<2x128xf32>
    %c0_4 = arith.constant 0 : index
    %c0_5 = arith.constant 0 : index
    %5 = vector.load %arg3[%c0_4, %c0_5] : memref<1024x128xf32, #tpu.memory_space<vmem>>, vector<1024x128xf32>
    %cst = arith.constant dense<0.000000e+00> : vector<2x128xf32>
    %6 = tpu.matmul %3, %5, %cst {dimension_numbers = #tpu.dot_dimension_numbers<[1], [0], [0], [1], [0, 0, 1, 1], [], []>} : vector<2x1024xf32>, vector<1024x128xf32>, vector<2x128xf32> -> vector<2x128xf32>
    %7 = arith.addf %4, %6 : vector<2x128xf32>
    %c0_6 = arith.constant 0 : index
    %c0_7 = arith.constant 0 : index
    %8 = vector.load %arg12[%c0_6, %c0_7] : memref<2x128xf32, #tpu.memory_space<vmem>>, vector<2x128xf32>
    tpu.vector_store %arg12[%c0_6, %c0_7], %7 {strides = array<i32>} : memref<2x128xf32, #tpu.memory_space<vmem>>, vector<2x128xf32>,
    %c0_i32_8 = arith.constant 0 : i32
    %9 = arith.cmpi eq, %arg1, %c0_i32_8 : i32
    %10 = arith.extui %9 : i1 to i32
    %c0_i32_9 = arith.constant 0 : i32
    %11 = arith.cmpi ne, %10, %c0_i32_9 : i32
    scf.if %11 {
      %c0_10 = arith.constant 0 : index
      %c0_11 = arith.constant 0 : index
      %12 = vector.load %arg12[%c0_10, %c0_11] : memref<2x128xf32, #tpu.memory_space<vmem>>, vector<2x128xf32>
      %c0_12 = arith.constant 0 : index
      %c0_13 = arith.constant 0 : index
      %13 = vector.load %arg4[%c0_12, %c0_13] : memref<1x128xf32, #tpu.memory_space<vmem>>, vector<1x128xf32>
      %14 = vector.broadcast %13 : vector<1x128xf32> to vector<2x128xf32>
      %15 = arith.addf %12, %14 : vector<2x128xf32>
      %cst_14 = arith.constant 0.000000e+00 : f32
      %16 = vector.broadcast %cst_14 : f32 to vector<2x128xf32>
      %17 = arith.maximumf %15, %16 : vector<2x128xf32>
      %c0_15 = arith.constant 0 : index
      %c0_16 = arith.constant 0 : index
      %18 = vector.load %arg9[%c0_15, %c0_16] : memref<2x128xf32, #tpu.memory_space<vmem>>, vector<2x128xf32>
      tpu.vector_store %arg9[%c0_15, %c0_16], %17 {strides = array<i32>} : memref<2x128xf32, #tpu.memory_space<vmem>>, vector<2x128xf32>,
      %c0_17 = arith.constant 0 : index
      %c0_18 = arith.constant 0 : index
      %19 = vector.load %arg5[%c0_17, %c0_18] : memref<128x128xf32, #tpu.memory_space<vmem>>, vector<128x128xf32>
      %cst_19 = arith.constant dense<0.000000e+00> : vector<2x128xf32>
      %20 = tpu.matmul %17, %19, %cst_19 {dimension_numbers = #tpu.dot_dimension_numbers<[1], [0], [0], [1], [0, 0, 1, 1], [], []>} : vector<2x128xf32>, vector<128x128xf32>, vector<2x128xf32> -> vector<2x128xf32>
      %c0_20 = arith.constant 0 : index
      %c0_21 = arith.constant 0 : index
      %21 = vector.load %arg6[%c0_20, %c0_21] : memref<1x128xf32, #tpu.memory_space<vmem>>, vector<1x128xf32>
      %22 = vector.broadcast %21 : vector<1x128xf32> to vector<2x128xf32>
      %23 = arith.addf %20, %22 : vector<2x128xf32>
      %cst_22 = arith.constant 0.000000e+00 : f32
      %24 = vector.broadcast %cst_22 : f32 to vector<2x128xf32>
      %25 = arith.maximumf %23, %24 : vector<2x128xf32>
      %c0_23 = arith.constant 0 : index
      %c0_24 = arith.constant 0 : index
      %26 = vector.load %arg10[%c0_23, %c0_24] : memref<2x128xf32, #tpu.memory_space<vmem>>, vector<2x128xf32>
      tpu.vector_store %arg10[%c0_23, %c0_24], %25 {strides = array<i32>} : memref<2x128xf32, #tpu.memory_space<vmem>>, vector<2x128xf32>,
      %c0_25 = arith.constant 0 : index
      %c0_26 = arith.constant 0 : index
      %27 = vector.load %arg7[%c0_25, %c0_26] : memref<128x128xf32, #tpu.memory_space<vmem>>, vector<128x128xf32>
      %cst_27 = arith.constant dense<0.000000e+00> : vector<2x128xf32>
      %28 = tpu.matmul %25, %27, %cst_27 {dimension_numbers = #tpu.dot_dimension_numbers<[1], [0], [0], [1], [0, 0, 1, 1], [], []>} : vector<2x128xf32>, vector<128x128xf32>, vector<2x128xf32> -> vector<2x128xf32>
      %c0_28 = arith.constant 0 : index
      %c0_29 = arith.constant 0 : index
      %29 = vector.load %arg8[%c0_28, %c0_29] : memref<1x128xf32, #tpu.memory_space<vmem>>, vector<1x128xf32>
      %30 = vector.broadcast %29 : vector<1x128xf32> to vector<2x128xf32>
      %31 = arith.addf %28, %30 : vector<2x128xf32>
      %c0_30 = arith.constant 0 : index
      %c0_31 = arith.constant 0 : index
      %32 = vector.load %arg11[%c0_30, %c0_31] : memref<2x128xf32, #tpu.memory_space<vmem>>, vector<2x128xf32>
      tpu.vector_store %arg11[%c0_30, %c0_31], %31 {strides = array<i32>} : memref<2x128xf32, #tpu.memory_space<vmem>>, vector<2x128xf32>,
    } else {
    }
    return
  }
  func.func @transform_0(%arg0: i32, %arg1: i32) -> (i32, i32) {
    %c0_i32 = arith.constant 0 : i32
    return %arg0, %arg1 : i32, i32
  }
  func.func @transform_1(%arg0: i32, %arg1: i32) -> (i32, i32) {
    %c0_i32 = arith.constant 0 : i32
    %c0_i32_0 = arith.constant 0 : i32
    %c0_i32_1 = arith.constant 0 : i32
    return %c0_i32, %c0_i32_0 : i32, i32
  }
  func.func @transform_2(%arg0: i32, %arg1: i32) -> (i32, i32) {
    %c0_i32 = arith.constant 0 : i32
    %c0_i32_0 = arith.constant 0 : i32
    %c0_i32_1 = arith.constant 0 : i32
    return %c0_i32, %c0_i32_0 : i32, i32
  }
  func.func @transform_3(%arg0: i32, %arg1: i32) -> (i32, i32) {
    %c0_i32 = arith.constant 0 : i32
    %c0_i32_0 = arith.constant 0 : i32
    %c0_i32_1 = arith.constant 0 : i32
    return %c0_i32, %c0_i32_0 : i32, i32
  }
  func.func @transform_4(%arg0: i32, %arg1: i32) -> (i32, i32) {
    %c0_i32 = arith.constant 0 : i32
    %c0_i32_0 = arith.constant 0 : i32
    %c0_i32_1 = arith.constant 0 : i32
    return %c0_i32, %c0_i32_0 : i32, i32
  }
  func.func @transform_5(%arg0: i32, %arg1: i32) -> (i32, i32) {
    %c0_i32 = arith.constant 0 : i32
    %c0_i32_0 = arith.constant 0 : i32
    %c0_i32_1 = arith.constant 0 : i32
    return %c0_i32, %c0_i32_0 : i32, i32
  }
  func.func @transform_6(%arg0: i32, %arg1: i32) -> (i32, i32) {
    %c0_i32 = arith.constant 0 : i32
    %c0_i32_0 = arith.constant 0 : i32
    %c0_i32_1 = arith.constant 0 : i32
    return %c0_i32, %c0_i32_0 : i32, i32
  }
  func.func @transform_7(%arg0: i32, %arg1: i32) -> (i32, i32) {
    %c0_i32 = arith.constant 0 : i32
    %c0_i32_0 = arith.constant 0 : i32
    return %arg0, %c0_i32 : i32, i32
  }
  func.func @transform_8(%arg0: i32, %arg1: i32) -> (i32, i32) {
    %c0_i32 = arith.constant 0 : i32
    %c0_i32_0 = arith.constant 0 : i32
    return %arg0, %c0_i32 : i32, i32
  }
  func.func @transform_9(%arg0: i32, %arg1: i32) -> (i32, i32) {
    %c0_i32 = arith.constant 0 : i32
    %c0_i32_0 = arith.constant 0 : i32
    return %arg0, %c0_i32 : i32, i32
  }
}

module attributes {stable_mosaic.version = 11 : i64} {
  func.func @base_block_kernel(%arg0: i32, %arg1: i32, %arg2: memref<2x1024xf32, #tpu.memory_space<vmem>>, %arg3: memref<1024x128xf32, #tpu.memory_space<vmem>>, %arg4: memref<1x128xf32, #tpu.memory_space<vmem>>, %arg5: memref<128x128xf32, #tpu.memory_space<vmem>>, %arg6: memref<1x128xf32, #tpu.memory_space<vmem>>, %arg7: memref<128x128xf32, #tpu.memory_space<vmem>>, %arg8: memref<1x128xf32, #tpu.memory_space<vmem>>, %arg9: memref<2x128xf32, #tpu.memory_space<vmem>>, %arg10: memref<2x128xf32, #tpu.memory_space<vmem>>, %arg11: memref<2x128xf32, #tpu.memory_space<vmem>>, %arg12: memref<2x128xf32, #tpu.memory_space<vmem>>) attributes {dimension_semantics = [#tpu.dimension_semantics<parallel>, #tpu.dimension_semantics<arbitrary>], iteration_bounds = array<i64: 1, 1>, scalar_prefetch = 0 : i64, scratch_operands = 1 : i64, tpu.core_type = #tpu.core_type<tc>, window_params = [{transform_indices = @transform_0, window_bounds = array<i64: 2, 1024>}, {pipeline_mode = #tpu.pipeline_mode<synchronous>, transform_indices = @transform_1, window_bounds = array<i64: 1024, 128>}, {pipeline_mode = #tpu.pipeline_mode<synchronous>, transform_indices = @transform_2, window_bounds = array<i64: 1, 128>}, {pipeline_mode = #tpu.pipeline_mode<synchronous>, transform_indices = @transform_3, window_bounds = array<i64: 128, 128>}, {pipeline_mode = #tpu.pipeline_mode<synchronous>, transform_indices = @transform_4, window_bounds = array<i64: 1, 128>}, {pipeline_mode = #tpu.pipeline_mode<synchronous>, transform_indices = @transform_5, window_bounds = array<i64: 128, 128>}, {pipeline_mode = #tpu.pipeline_mode<synchronous>, transform_indices = @transform_6, window_bounds = array<i64: 1, 128>}, {transform_indices = @transform_7, window_bounds = array<i64: 2, 128>}, {transform_indices = @transform_8, window_bounds = array<i64: 2, 128>}, {transform_indices = @transform_9, window_bounds = array<i64: 2, 128>}]} {
    %c0_i32 = arith.constant 0 : i32
    %0 = arith.cmpi eq, %arg1, %c0_i32 : i32
    %1 = arith.extui %0 : i1 to i32
    %c0_i32_0 = arith.constant 0 : i32
    %2 = arith.cmpi ne, %1, %c0_i32_0 : i32
    scf.if %2 {
      %cst_10 = arith.constant 0.000000e+00 : f32
      %12 = vector.broadcast %cst_10 : f32 to vector<2x128xf32>
      %c0_11 = arith.constant 0 : index
      %c0_12 = arith.constant 0 : index
      %13 = vector.load %arg12[%c0_11, %c0_12] : memref<2x128xf32, #tpu.memory_space<vmem>>, vector<2x128xf32>
      tpu.vector_store %arg12[%c0_11, %c0_12], %12 {strides = array<i32>} : memref<2x128xf32, #tpu.memory_space<vmem>>, vector<2x128xf32>,
    } else {
    }
    %c0 = arith.constant 0 : index
    %c0_1 = arith.constant 0 : index
    %3 = vector.load %arg2[%c0, %c0_1] : memref<2x1024xf32, #tpu.memory_space<vmem>>, vector<2x1024xf32>
    %c0_2 = arith.constant 0 : index
    %c0_3 = arith.constant 0 : index
    %4 = vector.load %arg12[%c0_2, %c0_3] : memref<2x128xf32, #tpu.memory_space<vmem>>, vector<2x128xf32>
    %c0_4 = arith.constant 0 : index
    %c0_5 = arith.constant 0 : index
    %5 = vector.load %arg3[%c0_4, %c0_5] : memref<1024x128xf32, #tpu.memory_space<vmem>>, vector<1024x128xf32>
    %cst = arith.constant dense<0.000000e+00> : vector<2x128xf32>
    %6 = tpu.matmul %3, %5, %cst {dimension_numbers = #tpu.dot_dimension_numbers<[1], [0], [0], [1], [0, 0, 1, 1], [], []>} : vector<2x1024xf32>, vector<1024x128xf32>, vector<2x128xf32> -> vector<2x128xf32>
    %7 = arith.addf %4, %6 : vector<2x128xf32>
    %c0_6 = arith.constant 0 : index
    %c0_7 = arith.constant 0 : index
    %8 = vector.load %arg12[%c0_6, %c0_7] : memref<2x128xf32, #tpu.memory_space<vmem>>, vector<2x128xf32>
    tpu.vector_store %arg12[%c0_6, %c0_7], %7 {strides = array<i32>} : memref<2x128xf32, #tpu.memory_space<vmem>>, vector<2x128xf32>,
    %c0_i32_8 = arith.constant 0 : i32
    %9 = arith.cmpi eq, %arg1, %c0_i32_8 : i32
    %10 = arith.extui %9 : i1 to i32
    %c0_i32_9 = arith.constant 0 : i32
    %11 = arith.cmpi ne, %10, %c0_i32_9 : i32
    scf.if %11 {
      %c0_10 = arith.constant 0 : index
      %c0_11 = arith.constant 0 : index
      %12 = vector.load %arg12[%c0_10, %c0_11] : memref<2x128xf32, #tpu.memory_space<vmem>>, vector<2x128xf32>
      %c0_12 = arith.constant 0 : index
      %c0_13 = arith.constant 0 : index
      %13 = vector.load %arg4[%c0_12, %c0_13] : memref<1x128xf32, #tpu.memory_space<vmem>>, vector<1x128xf32>
      %14 = vector.broadcast %13 : vector<1x128xf32> to vector<2x128xf32>
      %15 = arith.addf %12, %14 : vector<2x128xf32>
      %cst_14 = arith.constant 0.000000e+00 : f32
      %16 = vector.broadcast %cst_14 : f32 to vector<2x128xf32>
      %17 = arith.maximumf %15, %16 : vector<2x128xf32>
      %c0_15 = arith.constant 0 : index
      %c0_16 = arith.constant 0 : index
      %18 = vector.load %arg9[%c0_15, %c0_16] : memref<2x128xf32, #tpu.memory_space<vmem>>, vector<2x128xf32>
      tpu.vector_store %arg9[%c0_15, %c0_16], %17 {strides = array<i32>} : memref<2x128xf32, #tpu.memory_space<vmem>>, vector<2x128xf32>,
      %c0_17 = arith.constant 0 : index
      %c0_18 = arith.constant 0 : index
      %19 = vector.load %arg5[%c0_17, %c0_18] : memref<128x128xf32, #tpu.memory_space<vmem>>, vector<128x128xf32>
      %cst_19 = arith.constant dense<0.000000e+00> : vector<2x128xf32>
      %20 = tpu.matmul %17, %19, %cst_19 {dimension_numbers = #tpu.dot_dimension_numbers<[1], [0], [0], [1], [0, 0, 1, 1], [], []>} : vector<2x128xf32>, vector<128x128xf32>, vector<2x128xf32> -> vector<2x128xf32>
      %c0_20 = arith.constant 0 : index
      %c0_21 = arith.constant 0 : index
      %21 = vector.load %arg6[%c0_20, %c0_21] : memref<1x128xf32, #tpu.memory_space<vmem>>, vector<1x128xf32>
      %22 = vector.broadcast %21 : vector<1x128xf32> to vector<2x128xf32>
      %23 = arith.addf %20, %22 : vector<2x128xf32>
      %cst_22 = arith.constant 0.000000e+00 : f32
      %24 = vector.broadcast %cst_22 : f32 to vector<2x128xf32>
      %25 = arith.maximumf %23, %24 : vector<2x128xf32>
      %c0_23 = arith.constant 0 : index
      %c0_24 = arith.constant 0 : index
      %26 = vector.load %arg10[%c0_23, %c0_24] : memref<2x128xf32, #tpu.memory_space<vmem>>, vector<2x128xf32>
      tpu.vector_store %arg10[%c0_23, %c0_24], %25 {strides = array<i32>} : memref<2x128xf32, #tpu.memory_space<vmem>>, vector<2x128xf32>,
      %c0_25 = arith.constant 0 : index
      %c0_26 = arith.constant 0 : index
      %27 = vector.load %arg7[%c0_25, %c0_26] : memref<128x128xf32, #tpu.memory_space<vmem>>, vector<128x128xf32>
      %cst_27 = arith.constant dense<0.000000e+00> : vector<2x128xf32>
      %28 = tpu.matmul %25, %27, %cst_27 {dimension_numbers = #tpu.dot_dimension_numbers<[1], [0], [0], [1], [0, 0, 1, 1], [], []>} : vector<2x128xf32>, vector<128x128xf32>, vector<2x128xf32> -> vector<2x128xf32>
      %c0_28 = arith.constant 0 : index
      %c0_29 = arith.constant 0 : index
      %29 = vector.load %arg8[%c0_28, %c0_29] : memref<1x128xf32, #tpu.memory_space<vmem>>, vector<1x128xf32>
      %30 = vector.broadcast %29 : vector<1x128xf32> to vector<2x128xf32>
      %31 = arith.addf %28, %30 : vector<2x128xf32>
      %c0_30 = arith.constant 0 : index
      %c0_31 = arith.constant 0 : index
      %32 = vector.load %arg11[%c0_30, %c0_31] : memref<2x128xf32, #tpu.memory_space<vmem>>, vector<2x128xf32>
      tpu.vector_store %arg11[%c0_30, %c0_31], %31 {strides = array<i32>} : memref<2x128xf32, #tpu.memory_space<vmem>>, vector<2x128xf32>,
    } else {
    }
    return
  }
  func.func @transform_0(%arg0: i32, %arg1: i32) -> (i32, i32) {
    %c0_i32 = arith.constant 0 : i32
    return %arg0, %arg1 : i32, i32
  }
  func.func @transform_1(%arg0: i32, %arg1: i32) -> (i32, i32) {
    %c0_i32 = arith.constant 0 : i32
    %c0_i32_0 = arith.constant 0 : i32
    %c0_i32_1 = arith.constant 0 : i32
    return %c0_i32, %c0_i32_0 : i32, i32
  }
  func.func @transform_2(%arg0: i32, %arg1: i32) -> (i32, i32) {
    %c0_i32 = arith.constant 0 : i32
    %c0_i32_0 = arith.constant 0 : i32
    %c0_i32_1 = arith.constant 0 : i32
    return %c0_i32, %c0_i32_0 : i32, i32
  }
  func.func @transform_3(%arg0: i32, %arg1: i32) -> (i32, i32) {
    %c0_i32 = arith.constant 0 : i32
    %c0_i32_0 = arith.constant 0 : i32
    %c0_i32_1 = arith.constant 0 : i32
    return %c0_i32, %c0_i32_0 : i32, i32
  }
  func.func @transform_4(%arg0: i32, %arg1: i32) -> (i32, i32) {
    %c0_i32 = arith.constant 0 : i32
    %c0_i32_0 = arith.constant 0 : i32
    %c0_i32_1 = arith.constant 0 : i32
    return %c0_i32, %c0_i32_0 : i32, i32
  }
  func.func @transform_5(%arg0: i32, %arg1: i32) -> (i32, i32) {
    %c0_i32 = arith.constant 0 : i32
    %c0_i32_0 = arith.constant 0 : i32
    %c0_i32_1 = arith.constant 0 : i32
    return %c0_i32, %c0_i32_0 : i32, i32
  }
  func.func @transform_6(%arg0: i32, %arg1: i32) -> (i32, i32) {
    %c0_i32 = arith.constant 0 : i32
    %c0_i32_0 = arith.constant 0 : i32
    %c0_i32_1 = arith.constant 0 : i32
    return %c0_i32, %c0_i32_0 : i32, i32
  }
  func.func @transform_7(%arg0: i32, %arg1: i32) -> (i32, i32) {
    %c0_i32 = arith.constant 0 : i32
    %c0_i32_0 = arith.constant 0 : i32
    return %arg0, %c0_i32 : i32, i32
  }
  func.func @transform_8(%arg0: i32, %arg1: i32) -> (i32, i32) {
    %c0_i32 = arith.constant 0 : i32
    %c0_i32_0 = arith.constant 0 : i32
    return %arg0, %c0_i32 : i32, i32
  }
  func.func @transform_9(%arg0: i32, %arg1: i32) -> (i32, i32) {
    %c0_i32 = arith.constant 0 : i32
    %c0_i32_0 = arith.constant 0 : i32
    return %arg0, %c0_i32 : i32, i32
  }
}

</mosaic_0001>

<llo_original>
// kernel: tpu_custom_call.1
$region0: #{tpu_custom_call.1}
  #allocation0 [shape = 'u32[]', space=smem, size = 0x4, offset = 0x4, fixed_abs, tag = 'smem constant byte address 0x4 - core index']
  #allocation1 [shape = 'u32[144,128]{1,0:T(1,128)}', space=vmem, size = 0x12000, scoped, tag = 'internal scratch']
  #allocation2 [shape = 'f32[2,128]{1,0:T(2,128)}', space=vmem, size = 0x400, scoped, tag = 'scratch operand']
  %s0 = inlined_call_operand.hbm [shape: f32[2,1024], index: 0, kind: input, shape index: {}]
  %s1 = inlined_call_operand.hbm [shape: f32[1024,128], index: 1, kind: input, shape index: {}]
  %s2 = inlined_call_operand.vmem [shape: f32[1,128], index: 2, kind: input, shape index: {}]
  %s3 = inlined_call_operand.hbm [shape: f32[128,128], index: 3, kind: input, shape index: {}]
  %s4 = inlined_call_operand.vmem [shape: f32[1,128], index: 4, kind: input, shape index: {}]
  %s5 = inlined_call_operand.hbm [shape: f32[128,128], index: 5, kind: input, shape index: {}]
  %s6 = inlined_call_operand.vmem [shape: f32[1,128], index: 6, kind: input, shape index: {}]
  %s7 = inlined_call_operand.hbm [shape: f32[2,128], index: 7, kind: output, shape index: {0}]
  %s8 = inlined_call_operand.hbm [shape: f32[2,128], index: 8, kind: output, shape index: {1}]
  %s9 = inlined_call_operand.hbm [shape: f32[2,128], index: 9, kind: output, shape index: {2}]
  %10 = xla_tuple %s7, %s8, %s9
  %s11 = sld [smem:[#allocation0]]
  $region78: #{tpu_custom_call.1} parent=0
    _
  %s13 = ssub.s32 1, %s11
  %s14 = scalar_select 0, %s13, %s11
  $region1: #{tpu_custom_call.1} parent=0
    #allocation3 [shape = 'u8[8192]{0}', space=vmem, size = 0x2000, scoped, tag = 'input window, operand 0, single buffered']
    #allocation4 [shape = 's32[1]{0}', space=sflag, size = 0x4, scoped, tag = 'scoped memory for tpu_custom_call.1']
    #allocation5 [shape = 's32[1]{0}', space=sflag, size = 0x4, scoped, tag = 'scoped memory for tpu_custom_call.1']
    #allocation6 [shape = 'u8[524288]{0}', space=vmem, size = 0x80000, scoped, tag = 'input window, operand 1, single buffered']
    #allocation7 [shape = 's32[1]{0}', space=sflag, size = 0x4, scoped, tag = 'scoped memory for tpu_custom_call.1']
    #allocation8 [shape = 'u8[65536]{0}', space=vmem, size = 0x10000, scoped, tag = 'input window, operand 3, single buffered']
    #allocation9 [shape = 'u8[65536]{0}', space=vmem, size = 0x10000, scoped, tag = 'input window, operand 5, single buffered']
    #allocation10 [shape = 's32[1]{0}', space=sflag, size = 0x4, scoped, tag = 'scoped memory for tpu_custom_call.1']
    #allocation11 [shape = 'u8[1024]{0}', space=vmem, size = 0x400, scoped, tag = 'output window, operand 0, single buffered']
    #allocation12 [shape = 'u8[1024]{0}', space=vmem, size = 0x400, scoped, tag = 'output window, operand 1, single buffered']
    #allocation13 [shape = 's32[1]{0}', space=sflag, size = 0x4, scoped, tag = 'scoped memory for tpu_custom_call.1']
    #allocation14 [shape = 'u8[1024]{0}', space=vmem, size = 0x400, scoped, tag = 'output window, operand 2, single buffered']
    %15 = vsyncpa [#allocation4], 0
    %16 = vsyncpa [#allocation7], 0
    %17 = vsyncpa [#allocation10], 0
    %18 = vsyncpa [#allocation5], 0
    %19 = vsyncpa [#allocation13], 0
    // Predicated region
    $region2: #{tpu_custom_call.1} parent=1 // pred_check
      _
    $region3: #{tpu_custom_call.1} parent=1 // pred_check_branch
      %21 = sbr.rel (0) target = $region5
    $region4: #{tpu_custom_call.1} parent=1 // pred_region
      %s23 = ssub.s32 256, 256
      %24 = vsyncadd [#allocation4], %s23
      %s26 = sshll.u32 [#allocation3], 4
      %s27 = int_to_ptr.vmem [resolvable:$true] %s26
      %29 = dma.hbm_to_vmem [thread:$0]  %s0, 256, %s27, [#allocation4]
    $region5: #{tpu_custom_call.1} parent=1 // pred_fallthru
      _
    // Predicated region
    $region6: #{tpu_custom_call.1} parent=1 // pred_check
      _
    $region7: #{tpu_custom_call.1} parent=1 // pred_check_branch
      %31 = sbr.rel (0) target = $region9
    $region8: #{tpu_custom_call.1} parent=1 // pred_region
      %s33 = ssub.s32 16384, 16384
      %34 = vsyncadd [#allocation7], %s33
      %s35 = sshll.u32 [#allocation6], 4
      %s36 = int_to_ptr.vmem [resolvable:$true] %s35
      %41 = dma.hbm_to_vmem [thread:$0]  %s1, 16384, %s36, [#allocation7], 128, 128, 8
    $region9: #{tpu_custom_call.1} parent=1 // pred_fallthru
      _
    // Predicated region
    $region10: #{tpu_custom_call.1} parent=1 // pred_check
      _
    $region11: #{tpu_custom_call.1} parent=1 // pred_check_branch
      %43 = sbr.rel (0) target = $region13
    $region12: #{tpu_custom_call.1} parent=1 // pred_region
      _
    $region13: #{tpu_custom_call.1} parent=1 // pred_fallthru
      _
    // Predicated region
    $region14: #{tpu_custom_call.1} parent=1 // pred_check
      _
    $region15: #{tpu_custom_call.1} parent=1 // pred_check_branch
      %45 = sbr.rel (0) target = $region17
    $region16: #{tpu_custom_call.1} parent=1 // pred_region
      %s47 = ssub.s32 2048, 2048
      %48 = vsyncadd [#allocation7], %s47
      %s49 = sshll.u32 [#allocation8], 4
      %s50 = int_to_ptr.vmem [resolvable:$true] %s49
      %55 = dma.hbm_to_vmem [thread:$0]  %s3, 2048, %s50, [#allocation7], 128, 128, 8
    $region17: #{tpu_custom_call.1} parent=1 // pred_fallthru
      _
    // Predicated region
    $region18: #{tpu_custom_call.1} parent=1 // pred_check
      _
    $region19: #{tpu_custom_call.1} parent=1 // pred_check_branch
      %57 = sbr.rel (0) target = $region21
    $region20: #{tpu_custom_call.1} parent=1 // pred_region
      _
    $region21: #{tpu_custom_call.1} parent=1 // pred_fallthru
      _
    // Predicated region
    $region22: #{tpu_custom_call.1} parent=1 // pred_check
      _
    $region23: #{tpu_custom_call.1} parent=1 // pred_check_branch
      %59 = sbr.rel (0) target = $region25
    $region24: #{tpu_custom_call.1} parent=1 // pred_region
      %s61 = ssub.s32 2048, 2048
      %62 = vsyncadd [#allocation10], %s61
      %s63 = sshll.u32 [#allocation9], 4
      %s64 = int_to_ptr.vmem [resolvable:$true] %s63
      %69 = dma.hbm_to_vmem [thread:$0]  %s5, 2048, %s64, [#allocation10], 128, 128, 8
    $region25: #{tpu_custom_call.1} parent=1 // pred_fallthru
      _
    // Predicated region
    $region26: #{tpu_custom_call.1} parent=1 // pred_check
      _
    $region27: #{tpu_custom_call.1} parent=1 // pred_check_branch
      %71 = sbr.rel (0) target = $region29
    $region28: #{tpu_custom_call.1} parent=1 // pred_region
      _
    $region29: #{tpu_custom_call.1} parent=1 // pred_fallthru
      _
    // Predicated region
    $region30: #{tpu_custom_call.1} parent=1 // pred_check
      _
    $region31: #{tpu_custom_call.1} parent=1 // pred_check_branch
      %73 = sbr.rel (0) target = $region33
    $region32: #{tpu_custom_call.1} parent=1 // pred_region
      %74 = dma.done [#allocation4], 256
    $region33: #{tpu_custom_call.1} parent=1 // pred_fallthru
      _
    // Predicated region
    $region34: #{tpu_custom_call.1} parent=1 // pred_check
      _
    $region35: #{tpu_custom_call.1} parent=1 // pred_check_branch
      %76 = sbr.rel (0) target = $region37
    $region36: #{tpu_custom_call.1} parent=1 // pred_region
      %77 = dma.done [#allocation7], 16384
    $region37: #{tpu_custom_call.1} parent=1 // pred_fallthru
      _
    // Predicated region
    $region38: #{tpu_custom_call.1} parent=1 // pred_check
      _
    $region39: #{tpu_custom_call.1} parent=1 // pred_check_branch
      %79 = sbr.rel (0) target = $region41
    $region40: #{tpu_custom_call.1} parent=1 // pred_region
      %80 = dma.done [#allocation7], 2048
    $region41: #{tpu_custom_call.1} parent=1 // pred_fallthru
      _
    // Predicated region
    $region42: #{tpu_custom_call.1} parent=1 // pred_check
      _
    $region43: #{tpu_custom_call.1} parent=1 // pred_check_branch
      %82 = sbr.rel (0) target = $region45
    $region44: #{tpu_custom_call.1} parent=1 // pred_region
      %83 = dma.done [#allocation10], 2048
    $region45: #{tpu_custom_call.1} parent=1 // pred_fallthru
      _
    %p84 = scmp.eq.s32.totalorder 0, 0
    // Predicated region
    $region46: #{tpu_custom_call.1} parent=1 // pred_check
      %p85 = pneg %p84
    $region47: #{tpu_custom_call.1} parent=1 // pred_check_branch
      %87 = sbr.rel (%p85) target = $region49
    $region48: #{tpu_custom_call.1} parent=1 // pred_region
      %88 = vst [vmem:[#allocation2] sm:$0x3] 0.0
    $region49: #{tpu_custom_call.1} parent=1 // pred_fallthru
      _
    %v89 = vld [vmem:[#allocation3] sm:$0xff]
    %v90 = vld [vmem:[#allocation3 + $0x8] sm:$0xff]
    %v91 = vld [vmem:[#allocation2] sm:$0x3]
    %v92 = vld [vmem:[#allocation6] sm:$0xff]
    %v93 = vld [vmem:[#allocation6 + $0x8] sm:$0xff]
    %v94 = vld [vmem:[#allocation6 + $0x10] sm:$0xff]
    %v95 = vld [vmem:[#allocation6 + $0x18] sm:$0xff]
    %v96 = vld [vmem:[#allocation6 + $0x20] sm:$0xff]
    %v97 = vld [vmem:[#allocation6 + $0x28] sm:$0xff]
    %v98 = vld [vmem:[#allocation6 + $0x30] sm:$0xff]
    %v99 = vld [vmem:[#allocation6 + $0x38] sm:$0xff]
    %v100 = vld [vmem:[#allocation6 + $0x40] sm:$0xff]
    %v101 = vld [vmem:[#allocation6 + $0x48] sm:$0xff]
    %v102 = vld [vmem:[#allocation6 + $0x50] sm:$0xff]
    %v103 = vld [vmem:[#allocation6 + $0x58] sm:$0xff]
    %v104 = vld [vmem:[#allocation6 + $0x60] sm:$0xff]
    %v105 = vld [vmem:[#allocation6 + $0x68] sm:$0xff]
    %v106 = vld [vmem:[#allocation6 + $0x70] sm:$0xff]
    %v107 = vld [vmem:[#allocation6 + $0x78] sm:$0xff]
    %v108 = vld [vmem:[#allocation6 + $0x80] sm:$0xff]
    %v109 = vld [vmem:[#allocation6 + $0x88] sm:$0xff]
    %v110 = vld [vmem:[#allocation6 + $0x90] sm:$0xff]
    %v111 = vld [vmem:[#allocation6 + $0x98] sm:$0xff]
    %v112 = vld [vmem:[#allocation6 + $0xa0] sm:$0xff]
    %v113 = vld [vmem:[#allocation6 + $0xa8] sm:$0xff]
    %v114 = vld [vmem:[#allocation6 + $0xb0] sm:$0xff]
    %v115 = vld [vmem:[#allocation6 + $0xb8] sm:$0xff]
    %v116 = vld [vmem:[#allocation6 + $0xc0] sm:$0xff]
    %v117 = vld [vmem:[#allocation6 + $0xc8] sm:$0xff]
    %v118 = vld [vmem:[#allocation6 + $0xd0] sm:$0xff]
    %v119 = vld [vmem:[#allocation6 + $0xd8] sm:$0xff]
    %v120 = vld [vmem:[#allocation6 + $0xe0] sm:$0xff]
    %v121 = vld [vmem:[#allocation6 + $0xe8] sm:$0xff]
    %v122 = vld [vmem:[#allocation6 + $0xf0] sm:$0xff]
    %v123 = vld [vmem:[#allocation6 + $0xf8] sm:$0xff]
    %v124 = vld [vmem:[#allocation6 + $0x100] sm:$0xff]
    %v125 = vld [vmem:[#allocation6 + $0x108] sm:$0xff]
    %v126 = vld [vmem:[#allocation6 + $0x110] sm:$0xff]
    %v127 = vld [vmem:[#allocation6 + $0x118] sm:$0xff]
    %v128 = vld [vmem:[#allocation6 + $0x120] sm:$0xff]
    %v129 = vld [vmem:[#allocation6 + $0x128] sm:$0xff]
    %v130 = vld [vmem:[#allocation6 + $0x130] sm:$0xff]
    %v131 = vld [vmem:[#allocation6 + $0x138] sm:$0xff]
    %v132 = vld [vmem:[#allocation6 + $0x140] sm:$0xff]
    %v133 = vld [vmem:[#allocation6 + $0x148] sm:$0xff]
    %v134 = vld [vmem:[#allocation6 + $0x150] sm:$0xff]
    %v135 = vld [vmem:[#allocation6 + $0x158] sm:$0xff]
    %v136 = vld [vmem:[#allocation6 + $0x160] sm:$0xff]
    %v137 = vld [vmem:[#allocation6 + $0x168] sm:$0xff]
    %v138 = vld [vmem:[#allocation6 + $0x170] sm:$0xff]
    %v139 = vld [vmem:[#allocation6 + $0x178] sm:$0xff]
    %v140 = vld [vmem:[#allocation6 + $0x180] sm:$0xff]
    %v141 = vld [vmem:[#allocation6 + $0x188] sm:$0xff]
    %v142 = vld [vmem:[#allocation6 + $0x190] sm:$0xff]
    %v143 = vld [vmem:[#allocation6 + $0x198] sm:$0xff]
    %v144 = vld [vmem:[#allocation6 + $0x1a0] sm:$0xff]
    %v145 = vld [vmem:[#allocation6 + $0x1a8] sm:$0xff]
    %v146 = vld [vmem:[#allocation6 + $0x1b0] sm:$0xff]
    %v147 = vld [vmem:[#allocation6 + $0x1b8] sm:$0xff]
    %v148 = vld [vmem:[#allocation6 + $0x1c0] sm:$0xff]
    %v149 = vld [vmem:[#allocation6 + $0x1c8] sm:$0xff]
    %v150 = vld [vmem:[#allocation6 + $0x1d0] sm:$0xff]
    %v151 = vld [vmem:[#allocation6 + $0x1d8] sm:$0xff]
    %v152 = vld [vmem:[#allocation6 + $0x1e0] sm:$0xff]
    %v153 = vld [vmem:[#allocation6 + $0x1e8] sm:$0xff]
    %v154 = vld [vmem:[#allocation6 + $0x1f0] sm:$0xff]
    %v155 = vld [vmem:[#allocation6 + $0x1f8] sm:$0xff]
    %v156 = vld [vmem:[#allocation6 + $0x200] sm:$0xff]
    %v157 = vld [vmem:[#allocation6 + $0x208] sm:$0xff]
    %v158 = vld [vmem:[#allocation6 + $0x210] sm:$0xff]
    %v159 = vld [vmem:[#allocation6 + $0x218] sm:$0xff]
    %v160 = vld [vmem:[#allocation6 + $0x220] sm:$0xff]
    %v161 = vld [vmem:[#allocation6 + $0x228] sm:$0xff]
    %v162 = vld [vmem:[#allocation6 + $0x230] sm:$0xff]
    %v163 = vld [vmem:[#allocation6 + $0x238] sm:$0xff]
    %v164 = vld [vmem:[#allocation6 + $0x240] sm:$0xff]
    %v165 = vld [vmem:[#allocation6 + $0x248] sm:$0xff]
    %v166 = vld [vmem:[#allocation6 + $0x250] sm:$0xff]
    %v167 = vld [vmem:[#allocation6 + $0x258] sm:$0xff]
    %v168 = vld [vmem:[#allocation6 + $0x260] sm:$0xff]
    %v169 = vld [vmem:[#allocation6 + $0x268] sm:$0xff]
    %v170 = vld [vmem:[#allocation6 + $0x270] sm:$0xff]
    %v171 = vld [vmem:[#allocation6 + $0x278] sm:$0xff]
    %v172 = vld [vmem:[#allocation6 + $0x280] sm:$0xff]
    %v173 = vld [vmem:[#allocation6 + $0x288] sm:$0xff]
    %v174 = vld [vmem:[#allocation6 + $0x290] sm:$0xff]
    %v175 = vld [vmem:[#allocation6 + $0x298] sm:$0xff]
    %v176 = vld [vmem:[#allocation6 + $0x2a0] sm:$0xff]
    %v177 = vld [vmem:[#allocation6 + $0x2a8] sm:$0xff]
    %v178 = vld [vmem:[#allocation6 + $0x2b0] sm:$0xff]
    %v179 = vld [vmem:[#allocation6 + $0x2b8] sm:$0xff]
    %v180 = vld [vmem:[#allocation6 + $0x2c0] sm:$0xff]
    %v181 = vld [vmem:[#allocation6 + $0x2c8] sm:$0xff]
    %v182 = vld [vmem:[#allocation6 + $0x2d0] sm:$0xff]
    %v183 = vld [vmem:[#allocation6 + $0x2d8] sm:$0xff]
    %v184 = vld [vmem:[#allocation6 + $0x2e0] sm:$0xff]
    %v185 = vld [vmem:[#allocation6 + $0x2e8] sm:$0xff]
    %v186 = vld [vmem:[#allocation6 + $0x2f0] sm:$0xff]
    %v187 = vld [vmem:[#allocation6 + $0x2f8] sm:$0xff]
    %v188 = vld [vmem:[#allocation6 + $0x300] sm:$0xff]
    %v189 = vld [vmem:[#allocation6 + $0x308] sm:$0xff]
    %v190 = vld [vmem:[#allocation6 + $0x310] sm:$0xff]
    %v191 = vld [vmem:[#allocation6 + $0x318] sm:$0xff]
    %v192 = vld [vmem:[#allocation6 + $0x320] sm:$0xff]
    %v193 = vld [vmem:[#allocation6 + $0x328] sm:$0xff]
    %v194 = vld [vmem:[#allocation6 + $0x330] sm:$0xff]
    %v195 = vld [vmem:[#allocation6 + $0x338] sm:$0xff]
    %v196 = vld [vmem:[#allocation6 + $0x340] sm:$0xff]
    %v197 = vld [vmem:[#allocation6 + $0x348] sm:$0xff]
    %v198 = vld [vmem:[#allocation6 + $0x350] sm:$0xff]
    %v199 = vld [vmem:[#allocation6 + $0x358] sm:$0xff]
    %v200 = vld [vmem:[#allocation6 + $0x360] sm:$0xff]
    %v201 = vld [vmem:[#allocation6 + $0x368] sm:$0xff]
    %v202 = vld [vmem:[#allocation6 + $0x370] sm:$0xff]
    %v203 = vld [vmem:[#allocation6 + $0x378] sm:$0xff]
    %v204 = vld [vmem:[#allocation6 + $0x380] sm:$0xff]
    %v205 = vld [vmem:[#allocation6 + $0x388] sm:$0xff]
    %v206 = vld [vmem:[#allocation6 + $0x390] sm:$0xff]
    %v207 = vld [vmem:[#allocation6 + $0x398] sm:$0xff]
    %v208 = vld [vmem:[#allocation6 + $0x3a0] sm:$0xff]
    %v209 = vld [vmem:[#allocation6 + $0x3a8] sm:$0xff]
    %v210 = vld [vmem:[#allocation6 + $0x3b0] sm:$0xff]
    %v211 = vld [vmem:[#allocation6 + $0x3b8] sm:$0xff]
    %v212 = vld [vmem:[#allocation6 + $0x3c0] sm:$0xff]
    %v213 = vld [vmem:[#allocation6 + $0x3c8] sm:$0xff]
    %v214 = vld [vmem:[#allocation6 + $0x3d0] sm:$0xff]
    %v215 = vld [vmem:[#allocation6 + $0x3d8] sm:$0xff]
    %v216 = vld [vmem:[#allocation6 + $0x3e0] sm:$0xff]
    %v217 = vld [vmem:[#allocation6 + $0x3e8] sm:$0xff]
    %v218 = vld [vmem:[#allocation6 + $0x3f0] sm:$0xff]
    %v219 = vld [vmem:[#allocation6 + $0x3f8] sm:$0xff]
    %v222 = vcombine.high %v89, %v89
    %v224 = vunpack.c.l.s4 1983009808
    %v225 = vunpack.c.0.s8 %v224
    %v226 = vlaneseq
    %v227 = vshrl.u32 %v226, 7
    %v228 = vsub.s32 %v225, %v227
    %v229 = vrot.slane %v89, %v228
    %v231 = vunpack.c.l.s4 1983009808
    %v232 = vunpack.c.0.s8 %v231
    %v233 = vlaneseq
    %v234 = vshrl.u32 %v233, 7
    %v235 = vsub.s32 %v232, %v234
    %v236 = vrot.slane %v222, %v235
    %v237 = vcombine.high %v229, %v229
    %v238 = vcombine.high %v236, %v236
    %v239 = vcombine.high %v90, %v90
    %v241 = vunpack.c.l.s4 1983009808
    %v242 = vunpack.c.0.s8 %v241
    %v243 = vlaneseq
    %v244 = vshrl.u32 %v243, 7
    %v245 = vsub.s32 %v242, %v244
    %v246 = vrot.slane %v90, %v245
    %v248 = vunpack.c.l.s4 1983009808
    %v249 = vunpack.c.0.s8 %v248
    %v250 = vlaneseq
    %v251 = vshrl.u32 %v250, 7
    %v252 = vsub.s32 %v249, %v251
    %v253 = vrot.slane %v239, %v252
    %v254 = vcombine.high %v246, %v246
    %v255 = vcombine.high %v253, %v253
    %264 = vmatprep.subr.mxu0 0.0
    %265 = vmatpush1.msra.mxu0 %v92
    %266 = vmatprep.subr.mxu0 0.0
    %267 = vmatpush1.msra.mxu0 %v93
    %268 = vmatprep.subr.mxu0 0.0
    %269 = vmatpush1.msra.mxu0 %v94
    %270 = vmatprep.subr.mxu0 0.0
    %271 = vmatpush1.msra.mxu0 %v95
    %272 = vmatprep.subr.mxu0 0.0
    %273 = vmatpush1.msra.mxu0 %v96
    %274 = vmatprep.subr.mxu0 0.0
    %275 = vmatpush1.msra.mxu0 %v97
    %276 = vmatprep.subr.mxu0 0.0
    %277 = vmatpush1.msra.mxu0 %v98
    %278 = vmatprep.subr.mxu0 0.0
    %279 = vmatpush1.msra.mxu0 %v99
    %280 = vmatprep.subr.mxu0 0.0
    %281 = vmatpush1.msra.mxu0 %v100
    %282 = vmatprep.subr.mxu0 0.0
    %283 = vmatpush1.msra.mxu0 %v101
    %284 = vmatprep.subr.mxu0 0.0
    %285 = vmatpush1.msra.mxu0 %v102
    %286 = vmatprep.subr.mxu0 0.0
    %287 = vmatpush1.msra.mxu0 %v103
    %288 = vmatprep.subr.mxu0 0.0
    %289 = vmatpush1.msra.mxu0 %v104
    %290 = vmatprep.subr.mxu0 0.0
    %291 = vmatpush1.msra.mxu0 %v105
    %292 = vmatprep.subr.mxu0 0.0
    %293 = vmatpush1.msra.mxu0 %v106
    %294 = vmatprep.subr.mxu0 0.0
    %295 = vmatpush1.msra.mxu0 %v107
    %296 = vmatprep.subr.mxu0 0.0
    %297 = vmatpush1.msra.mxu0 %v108
    %298 = vmatprep.subr.mxu0 0.0
    %299 = vmatpush1.msra.mxu0 %v109
    %300 = vmatprep.subr.mxu0 0.0
    %301 = vmatpush1.msra.mxu0 %v110
    %302 = vmatprep.subr.mxu0 0.0
    %303 = vmatpush1.msra.mxu0 %v111
    %304 = vmatprep.subr.mxu0 0.0
    %305 = vmatpush1.msra.mxu0 %v112
    %306 = vmatprep.subr.mxu0 0.0
    %307 = vmatpush1.msra.mxu0 %v113
    %308 = vmatprep.subr.mxu0 0.0
    %309 = vmatpush1.msra.mxu0 %v114
    %310 = vmatprep.subr.mxu0 0.0
    %311 = vmatpush1.msra.mxu0 %v115
    %312 = vmatprep.subr.mxu0 0.0
    %313 = vmatpush1.msra.mxu0 %v116
    %314 = vmatprep.subr.mxu0 0.0
    %315 = vmatpush1.msra.mxu0 %v117
    %316 = vmatprep.subr.mxu0 0.0
    %317 = vmatpush1.msra.mxu0 %v118
    %318 = vmatprep.subr.mxu0 0.0
    %319 = vmatpush1.msra.mxu0 %v119
    %320 = vmatprep.subr.mxu0 0.0
    %321 = vmatpush1.msra.mxu0 %v120
    %322 = vmatprep.subr.mxu0 0.0
    %323 = vmatpush1.msra.mxu0 %v121
    %324 = vmatprep.subr.mxu0 0.0
    %325 = vmatpush1.msra.mxu0 %v122
    %326 = vmatprep.subr.mxu0 0.0
    %327 = vmatpush1.msra.mxu0 %v123
    %328 = vmatprep.mubr.f32.mxu0 %v237
    %329 = vmatmul.mubr.f32.gmra.mrb[0].mxu0 %v229
    %v330 = vpop.f32.mrb[0].mxu0
    %v331 = vadd.f32 0.0, %v330
    %v332 = vpop.f32.mrb[0].mxu0
    %333 = vdwg.mxu0
    %334 = vmatprep.subr.mxu0 0.0
    %335 = vmatpush1.msra.mxu0 %v124
    %336 = vmatprep.subr.mxu0 0.0
    %337 = vmatpush1.msra.mxu0 %v125
    %338 = vmatprep.subr.mxu0 0.0
    %339 = vmatpush1.msra.mxu0 %v126
    %340 = vmatprep.subr.mxu0 0.0
    %341 = vmatpush1.msra.mxu0 %v127
    %342 = vmatprep.subr.mxu0 0.0
    %343 = vmatpush1.msra.mxu0 %v128
    %344 = vmatprep.subr.mxu0 0.0
    %345 = vmatpush1.msra.mxu0 %v129
    %346 = vmatprep.subr.mxu0 0.0
    %347 = vmatpush1.msra.mxu0 %v130
    %348 = vmatprep.subr.mxu0 0.0
    %349 = vmatpush1.msra.mxu0 %v131
    %350 = vmatprep.subr.mxu0 0.0
    %351 = vmatpush1.msra.mxu0 %v132
    %352 = vmatprep.subr.mxu0 0.0
    %353 = vmatpush1.msra.mxu0 %v133
    %354 = vmatprep.subr.mxu0 0.0
    %355 = vmatpush1.msra.mxu0 %v134
    %356 = vmatprep.subr.mxu0 0.0
    %357 = vmatpush1.msra.mxu0 %v135
    %358 = vmatprep.subr.mxu0 0.0
    %359 = vmatpush1.msra.mxu0 %v136
    %360 = vmatprep.subr.mxu0 0.0
    %361 = vmatpush1.msra.mxu0 %v137
    %362 = vmatprep.subr.mxu0 0.0
    %363 = vmatpush1.msra.mxu0 %v138
    %364 = vmatprep.subr.mxu0 0.0
    %365 = vmatpush1.msra.mxu0 %v139
    %366 = vmatprep.subr.mxu0 0.0
    %367 = vmatpush1.msra.mxu0 %v140
    %368 = vmatprep.subr.mxu0 0.0
    %369 = vmatpush1.msra.mxu0 %v141
    %370 = vmatprep.subr.mxu0 0.0
    %371 = vmatpush1.msra.mxu0 %v142
    %372 = vmatprep.subr.mxu0 0.0
    %373 = vmatpush1.msra.mxu0 %v143
    %374 = vmatprep.subr.mxu0 0.0
    %375 = vmatpush1.msra.mxu0 %v144
    %376 = vmatprep.subr.mxu0 0.0
    %377 = vmatpush1.msra.mxu0 %v145
    %378 = vmatprep.subr.mxu0 0.0
    %379 = vmatpush1.msra.mxu0 %v146
    %380 = vmatprep.subr.mxu0 0.0
    %381 = vmatpush1.msra.mxu0 %v147
    %382 = vmatprep.subr.mxu0 0.0
    %383 = vmatpush1.msra.mxu0 %v148
    %384 = vmatprep.subr.mxu0 0.0
    %385 = vmatpush1.msra.mxu0 %v149
    %386 = vmatprep.subr.mxu0 0.0
    %387 = vmatpush1.msra.mxu0 %v150
    %388 = vmatprep.subr.mxu0 0.0
    %389 = vmatpush1.msra.mxu0 %v151
    %390 = vmatprep.subr.mxu0 0.0
    %391 = vmatpush1.msra.mxu0 %v152
    %392 = vmatprep.subr.mxu0 0.0
    %393 = vmatpush1.msra.mxu0 %v153
    %394 = vmatprep.subr.mxu0 0.0
    %395 = vmatpush1.msra.mxu0 %v154
    %396 = vmatprep.subr.mxu0 0.0
    %397 = vmatpush1.msra.mxu0 %v155
    %398 = vmatprep.mubr.f32.mxu0 %v238
    %399 = vmatmul.mubr.f32.gmra.mrb[0].mxu0 %v236
    %v400 = vpop.f32.mrb[0].mxu0
    %v401 = vadd.f32 %v331, %v400
    %v402 = vpop.f32.mrb[0].mxu0
    %403 = vdwg.mxu0
    %404 = vmatprep.subr.mxu0 0.0
    %405 = vmatpush1.msra.mxu0 %v156
    %406 = vmatprep.subr.mxu0 0.0
    %407 = vmatpush1.msra.mxu0 %v157
    %408 = vmatprep.subr.mxu0 0.0
    %409 = vmatpush1.msra.mxu0 %v158
    %410 = vmatprep.subr.mxu0 0.0
    %411 = vmatpush1.msra.mxu0 %v159
    %412 = vmatprep.subr.mxu0 0.0
    %413 = vmatpush1.msra.mxu0 %v160
    %414 = vmatprep.subr.mxu0 0.0
    %415 = vmatpush1.msra.mxu0 %v161
    %416 = vmatprep.subr.mxu0 0.0
    %417 = vmatpush1.msra.mxu0 %v162
    %418 = vmatprep.subr.mxu0 0.0
    %419 = vmatpush1.msra.mxu0 %v163
    %420 = vmatprep.subr.mxu0 0.0
    %421 = vmatpush1.msra.mxu0 %v164
    %422 = vmatprep.subr.mxu0 0.0
    %423 = vmatpush1.msra.mxu0 %v165
    %424 = vmatprep.subr.mxu0 0.0
    %425 = vmatpush1.msra.mxu0 %v166
    %426 = vmatprep.subr.mxu0 0.0
    %427 = vmatpush1.msra.mxu0 %v167
    %428 = vmatprep.subr.mxu0 0.0
    %429 = vmatpush1.msra.mxu0 %v168
    %430 = vmatprep.subr.mxu0 0.0
    %431 = vmatpush1.msra.mxu0 %v169
    %432 = vmatprep.subr.mxu0 0.0
    %433 = vmatpush1.msra.mxu0 %v170
    %434 = vmatprep.subr.mxu0 0.0
    %435 = vmatpush1.msra.mxu0 %v171
    %436 = vmatprep.subr.mxu0 0.0
    %437 = vmatpush1.msra.mxu0 %v172
    %438 = vmatprep.subr.mxu0 0.0
    %439 = vmatpush1.msra.mxu0 %v173
    %440 = vmatprep.subr.mxu0 0.0
    %441 = vmatpush1.msra.mxu0 %v174
    %442 = vmatprep.subr.mxu0 0.0
    %443 = vmatpush1.msra.mxu0 %v175
    %444 = vmatprep.subr.mxu0 0.0
    %445 = vmatpush1.msra.mxu0 %v176
    %446 = vmatprep.subr.mxu0 0.0
    %447 = vmatpush1.msra.mxu0 %v177
    %448 = vmatprep.subr.mxu0 0.0
    %449 = vmatpush1.msra.mxu0 %v178
    %450 = vmatprep.subr.mxu0 0.0
    %451 = vmatpush1.msra.mxu0 %v179
    %452 = vmatprep.subr.mxu0 0.0
    %453 = vmatpush1.msra.mxu0 %v180
    %454 = vmatprep.subr.mxu0 0.0
    %455 = vmatpush1.msra.mxu0 %v181
    %456 = vmatprep.subr.mxu0 0.0
    %457 = vmatpush1.msra.mxu0 %v182
    %458 = vmatprep.subr.mxu0 0.0
    %459 = vmatpush1.msra.mxu0 %v183
    %460 = vmatprep.subr.mxu0 0.0
    %461 = vmatpush1.msra.mxu0 %v184
    %462 = vmatprep.subr.mxu0 0.0
    %463 = vmatpush1.msra.mxu0 %v185
    %464 = vmatprep.subr.mxu0 0.0
    %465 = vmatpush1.msra.mxu0 %v186
    %466 = vmatprep.subr.mxu0 0.0
    %467 = vmatpush1.msra.mxu0 %v187
    %468 = vmatprep.mubr.f32.mxu0 %v254
    %469 = vmatmul.mubr.f32.gmra.mrb[0].mxu0 %v246
    %v470 = vpop.f32.mrb[0].mxu0
    %v471 = vadd.f32 %v401, %v470
    %v472 = vpop.f32.mrb[0].mxu0
    %473 = vdwg.mxu0
    %474 = vmatprep.subr.mxu0 0.0
    %475 = vmatpush1.msra.mxu0 %v188
    %476 = vmatprep.subr.mxu0 0.0
    %477 = vmatpush1.msra.mxu0 %v189
    %478 = vmatprep.subr.mxu0 0.0
    %479 = vmatpush1.msra.mxu0 %v190
    %480 = vmatprep.subr.mxu0 0.0
    %481 = vmatpush1.msra.mxu0 %v191
    %482 = vmatprep.subr.mxu0 0.0
    %483 = vmatpush1.msra.mxu0 %v192
    %484 = vmatprep.subr.mxu0 0.0
    %485 = vmatpush1.msra.mxu0 %v193
    %486 = vmatprep.subr.mxu0 0.0
    %487 = vmatpush1.msra.mxu0 %v194
    %488 = vmatprep.subr.mxu0 0.0
    %489 = vmatpush1.msra.mxu0 %v195
    %490 = vmatprep.subr.mxu0 0.0
    %491 = vmatpush1.msra.mxu0 %v196
    %492 = vmatprep.subr.mxu0 0.0
    %493 = vmatpush1.msra.mxu0 %v197
    %494 = vmatprep.subr.mxu0 0.0
    %495 = vmatpush1.msra.mxu0 %v198
    %496 = vmatprep.subr.mxu0 0.0
    %497 = vmatpush1.msra.mxu0 %v199
    %498 = vmatprep.subr.mxu0 0.0
    %499 = vmatpush1.msra.mxu0 %v200
    %500 = vmatprep.subr.mxu0 0.0
    %501 = vmatpush1.msra.mxu0 %v201
    %502 = vmatprep.subr.mxu0 0.0
    %503 = vmatpush1.msra.mxu0 %v202
    %504 = vmatprep.subr.mxu0 0.0
    %505 = vmatpush1.msra.mxu0 %v203
    %506 = vmatprep.subr.mxu0 0.0
    %507 = vmatpush1.msra.mxu0 %v204
    %508 = vmatprep.subr.mxu0 0.0
    %509 = vmatpush1.msra.mxu0 %v205
    %510 = vmatprep.subr.mxu0 0.0
    %511 = vmatpush1.msra.mxu0 %v206
    %512 = vmatprep.subr.mxu0 0.0
    %513 = vmatpush1.msra.mxu0 %v207
    %514 = vmatprep.subr.mxu0 0.0
    %515 = vmatpush1.msra.mxu0 %v208
    %516 = vmatprep.subr.mxu0 0.0
    %517 = vmatpush1.msra.mxu0 %v209
    %518 = vmatprep.subr.mxu0 0.0
    %519 = vmatpush1.msra.mxu0 %v210
    %520 = vmatprep.subr.mxu0 0.0
    %521 = vmatpush1.msra.mxu0 %v211
    %522 = vmatprep.subr.mxu0 0.0
    %523 = vmatpush1.msra.mxu0 %v212
    %524 = vmatprep.subr.mxu0 0.0
    %525 = vmatpush1.msra.mxu0 %v213
    %526 = vmatprep.subr.mxu0 0.0
    %527 = vmatpush1.msra.mxu0 %v214
    %528 = vmatprep.subr.mxu0 0.0
    %529 = vmatpush1.msra.mxu0 %v215
    %530 = vmatprep.subr.mxu0 0.0
    %531 = vmatpush1.msra.mxu0 %v216
    %532 = vmatprep.subr.mxu0 0.0
    %533 = vmatpush1.msra.mxu0 %v217
    %534 = vmatprep.subr.mxu0 0.0
    %535 = vmatpush1.msra.mxu0 %v218
    %536 = vmatprep.subr.mxu0 0.0
    %537 = vmatpush1.msra.mxu0 %v219
    %538 = vmatprep.mubr.f32.mxu0 %v255
    %539 = vmatmul.mubr.f32.gmra.mrb[0].mxu0 %v253
    %v540 = vpop.f32.mrb[0].mxu0
    %v541 = vadd.f32 %v471, %v540
    %v542 = vpop.f32.mrb[0].mxu0
    %543 = vdwg.mxu0
    %v544 = vadd.f32 %v91, %v541
    %545 = vst [vmem:[#allocation2] sm:$0x3] %v544
    // Predicated region
    $region50: #{tpu_custom_call.1} parent=1 // pred_check
      %p546 = pneg %p84
    $region51: #{tpu_custom_call.1} parent=1 // pred_check_branch
      %548 = sbr.rel (%p546) target = $region53
    $region52: #{tpu_custom_call.1} parent=1 // pred_region
      %v549 = vld [vmem:[#allocation2] sm:$0x3]
      %v550 = vld [vmem:[%s2] sm:$0x1]
      %v552 = vlaneseq
      %v553 = vshrl.u32 %v552, 7
      %v554 = vsub.s32 0, %v553
      %v555 = vrot.slane %v550, %v554
      %v557 = vadd.f32 %v549, %v555
      %v558 = vmax.f32 %v557, 0.0
      %559 = vst [vmem:[#allocation11] sm:$0x3] %v558
      %v560 = vld [vmem:[#allocation8] sm:$0xff]
      %v561 = vld [vmem:[#allocation8 + $0x8] sm:$0xff]
      %v562 = vld [vmem:[#allocation8 + $0x10] sm:$0xff]
      %v563 = vld [vmem:[#allocation8 + $0x18] sm:$0xff]
      %v564 = vld [vmem:[#allocation8 + $0x20] sm:$0xff]
      %v565 = vld [vmem:[#allocation8 + $0x28] sm:$0xff]
      %v566 = vld [vmem:[#allocation8 + $0x30] sm:$0xff]
      %v567 = vld [vmem:[#allocation8 + $0x38] sm:$0xff]
      %v568 = vld [vmem:[#allocation8 + $0x40] sm:$0xff]
      %v569 = vld [vmem:[#allocation8 + $0x48] sm:$0xff]
      %v570 = vld [vmem:[#allocation8 + $0x50] sm:$0xff]
      %v571 = vld [vmem:[#allocation8 + $0x58] sm:$0xff]
      %v572 = vld [vmem:[#allocation8 + $0x60] sm:$0xff]
      %v573 = vld [vmem:[#allocation8 + $0x68] sm:$0xff]
      %v574 = vld [vmem:[#allocation8 + $0x70] sm:$0xff]
      %v575 = vld [vmem:[#allocation8 + $0x78] sm:$0xff]
      %v576 = vld [vmem:[%s4] sm:$0x1]
      %v578 = vlaneseq
      %v579 = vshrl.u32 %v578, 7
      %v580 = vsub.s32 0, %v579
      %v581 = vrot.slane %v576, %v580
      %583 = vmatprep.subr.mxu0 0.0
      %584 = vmatpush1.msra.mxu0 %v560
      %585 = vmatprep.subr.mxu0 0.0
      %586 = vmatpush1.msra.mxu0 %v561
      %587 = vmatprep.subr.mxu0 0.0
      %588 = vmatpush1.msra.mxu0 %v562
      %589 = vmatprep.subr.mxu0 0.0
      %590 = vmatpush1.msra.mxu0 %v563
      %591 = vmatprep.subr.mxu0 0.0
      %592 = vmatpush1.msra.mxu0 %v564
      %593 = vmatprep.subr.mxu0 0.0
      %594 = vmatpush1.msra.mxu0 %v565
      %595 = vmatprep.subr.mxu0 0.0
      %596 = vmatpush1.msra.mxu0 %v566
      %597 = vmatprep.subr.mxu0 0.0
      %598 = vmatpush1.msra.mxu0 %v567
      %599 = vmatprep.subr.mxu0 0.0
      %600 = vmatpush1.msra.mxu0 %v568
      %601 = vmatprep.subr.mxu0 0.0
      %602 = vmatpush1.msra.mxu0 %v569
      %603 = vmatprep.subr.mxu0 0.0
      %604 = vmatpush1.msra.mxu0 %v570
      %605 = vmatprep.subr.mxu0 0.0
      %606 = vmatpush1.msra.mxu0 %v571
      %607 = vmatprep.subr.mxu0 0.0
      %608 = vmatpush1.msra.mxu0 %v572
      %609 = vmatprep.subr.mxu0 0.0
      %610 = vmatpush1.msra.mxu0 %v573
      %611 = vmatprep.subr.mxu0 0.0
      %612 = vmatpush1.msra.mxu0 %v574
      %613 = vmatprep.subr.mxu0 0.0
      %614 = vmatpush1.msra.mxu0 %v575
      %615 = vmatprep.subr.mxu0 0.0
      %616 = vmatpush1.msra.mxu0 0.0
      %617 = vmatprep.subr.mxu0 0.0
      %618 = vmatpush1.msra.mxu0 0.0
      %619 = vmatprep.subr.mxu0 0.0
      %620 = vmatpush1.msra.mxu0 0.0
      %621 = vmatprep.subr.mxu0 0.0
      %622 = vmatpush1.msra.mxu0 0.0
      %623 = vmatprep.subr.mxu0 0.0
      %624 = vmatpush1.msra.mxu0 0.0
      %625 = vmatprep.subr.mxu0 0.0
      %626 = vmatpush1.msra.mxu0 0.0
      %627 = vmatprep.subr.mxu0 0.0
      %628 = vmatpush1.msra.mxu0 0.0
      %629 = vmatprep.subr.mxu0 0.0
      %630 = vmatpush1.msra.mxu0 0.0
      %631 = vmatprep.subr.mxu0 0.0
      %632 = vmatpush1.msra.mxu0 0.0
      %633 = vmatprep.subr.mxu0 0.0
      %634 = vmatpush1.msra.mxu0 0.0
      %635 = vmatprep.subr.mxu0 0.0
      %636 = vmatpush1.msra.mxu0 0.0
      %637 = vmatprep.subr.mxu0 0.0
      %638 = vmatpush1.msra.mxu0 0.0
      %639 = vmatprep.subr.mxu0 0.0
      %640 = vmatpush1.msra.mxu0 0.0
      %641 = vmatprep.subr.mxu0 0.0
      %642 = vmatpush1.msra.mxu0 0.0
      %643 = vmatprep.subr.mxu0 0.0
      %644 = vmatpush1.msra.mxu0 0.0
      %645 = vmatprep.subr.mxu0 0.0
      %646 = vmatpush1.msra.mxu0 0.0
      %647 = vmatprep.mubr.f32.mxu0 0.0
      %648 = vmatmul.mubr.f32.gmra.mrb[0].mxu0 %v558
      %v649 = vpop.f32.mrb[0].mxu0
      %v650 = vadd.f32 %v581, %v649
      %v651 = vpop.f32.mrb[0].mxu0
      %652 = vdwg.mxu0
      %v653 = vmax.f32 %v650, 0.0
      %654 = vst [vmem:[#allocation12] sm:$0x3] %v653
      %v655 = vld [vmem:[#allocation9] sm:$0xff]
      %v656 = vld [vmem:[#allocation9 + $0x8] sm:$0xff]
      %v657 = vld [vmem:[#allocation9 + $0x10] sm:$0xff]
      %v658 = vld [vmem:[#allocation9 + $0x18] sm:$0xff]
      %v659 = vld [vmem:[#allocation9 + $0x20] sm:$0xff]
      %v660 = vld [vmem:[#allocation9 + $0x28] sm:$0xff]
      %v661 = vld [vmem:[#allocation9 + $0x30] sm:$0xff]
      %v662 = vld [vmem:[#allocation9 + $0x38] sm:$0xff]
      %v663 = vld [vmem:[#allocation9 + $0x40] sm:$0xff]
      %v664 = vld [vmem:[#allocation9 + $0x48] sm:$0xff]
      %v665 = vld [vmem:[#allocation9 + $0x50] sm:$0xff]
      %v666 = vld [vmem:[#allocation9 + $0x58] sm:$0xff]
      %v667 = vld [vmem:[#allocation9 + $0x60] sm:$0xff]
      %v668 = vld [vmem:[#allocation9 + $0x68] sm:$0xff]
      %v669 = vld [vmem:[#allocation9 + $0x70] sm:$0xff]
      %v670 = vld [vmem:[#allocation9 + $0x78] sm:$0xff]
      %v671 = vld [vmem:[%s6] sm:$0x1]
      %v673 = vlaneseq
      %v674 = vshrl.u32 %v673, 7
      %v675 = vsub.s32 0, %v674
      %v676 = vrot.slane %v671, %v675
      %678 = vmatprep.subr.mxu0 0.0
      %679 = vmatpush1.msra.mxu0 %v655
      %680 = vmatprep.subr.mxu0 0.0
      %681 = vmatpush1.msra.mxu0 %v656
      %682 = vmatprep.subr.mxu0 0.0
      %683 = vmatpush1.msra.mxu0 %v657
      %684 = vmatprep.subr.mxu0 0.0
      %685 = vmatpush1.msra.mxu0 %v658
      %686 = vmatprep.subr.mxu0 0.0
      %687 = vmatpush1.msra.mxu0 %v659
      %688 = vmatprep.subr.mxu0 0.0
      %689 = vmatpush1.msra.mxu0 %v660
      %690 = vmatprep.subr.mxu0 0.0
      %691 = vmatpush1.msra.mxu0 %v661
      %692 = vmatprep.subr.mxu0 0.0
      %693 = vmatpush1.msra.mxu0 %v662
      %694 = vmatprep.subr.mxu0 0.0
      %695 = vmatpush1.msra.mxu0 %v663
      %696 = vmatprep.subr.mxu0 0.0
      %697 = vmatpush1.msra.mxu0 %v664
      %698 = vmatprep.subr.mxu0 0.0
      %699 = vmatpush1.msra.mxu0 %v665
      %700 = vmatprep.subr.mxu0 0.0
      %701 = vmatpush1.msra.mxu0 %v666
      %702 = vmatprep.subr.mxu0 0.0
      %703 = vmatpush1.msra.mxu0 %v667
      %704 = vmatprep.subr.mxu0 0.0
      %705 = vmatpush1.msra.mxu0 %v668
      %706 = vmatprep.subr.mxu0 0.0
      %707 = vmatpush1.msra.mxu0 %v669
      %708 = vmatprep.subr.mxu0 0.0
      %709 = vmatpush1.msra.mxu0 %v670
      %710 = vmatprep.subr.mxu0 0.0
      %711 = vmatpush1.msra.mxu0 0.0
      %712 = vmatprep.subr.mxu0 0.0
      %713 = vmatpush1.msra.mxu0 0.0
      %714 = vmatprep.subr.mxu0 0.0
      %715 = vmatpush1.msra.mxu0 0.0
      %716 = vmatprep.subr.mxu0 0.0
      %717 = vmatpush1.msra.mxu0 0.0
      %718 = vmatprep.subr.mxu0 0.0
      %719 = vmatpush1.msra.mxu0 0.0
      %720 = vmatprep.subr.mxu0 0.0
      %721 = vmatpush1.msra.mxu0 0.0
      %722 = vmatprep.subr.mxu0 0.0
      %723 = vmatpush1.msra.mxu0 0.0
      %724 = vmatprep.subr.mxu0 0.0
      %725 = vmatpush1.msra.mxu0 0.0
      %726 = vmatprep.subr.mxu0 0.0
      %727 = vmatpush1.msra.mxu0 0.0
      %728 = vmatprep.subr.mxu0 0.0
      %729 = vmatpush1.msra.mxu0 0.0
      %730 = vmatprep.subr.mxu0 0.0
      %731 = vmatpush1.msra.mxu0 0.0
      %732 = vmatprep.subr.mxu0 0.0
      %733 = vmatpush1.msra.mxu0 0.0
      %734 = vmatprep.subr.mxu0 0.0
      %735 = vmatpush1.msra.mxu0 0.0
      %736 = vmatprep.subr.mxu0 0.0
      %737 = vmatpush1.msra.mxu0 0.0
      %738 = vmatprep.subr.mxu0 0.0
      %739 = vmatpush1.msra.mxu0 0.0
      %740 = vmatprep.subr.mxu0 0.0
      %741 = vmatpush1.msra.mxu0 0.0
      %742 = vmatprep.mubr.f32.mxu0 0.0
      %743 = vmatmul.mubr.f32.gmra.mrb[0].mxu0 %v653
      %v744 = vpop.f32.mrb[0].mxu0
      %v745 = vadd.f32 %v676, %v744
      %v746 = vpop.f32.mrb[0].mxu0
      %747 = vdwg.mxu0
      %748 = vst [vmem:[#allocation14] sm:$0x3] %v745
    $region53: #{tpu_custom_call.1} parent=1 // pred_fallthru
      _
    // Predicated region
    $region54: #{tpu_custom_call.1} parent=1 // pred_check
      _
    $region55: #{tpu_custom_call.1} parent=1 // pred_check_branch
      %750 = sbr.rel (0) target = $region57
    $region56: #{tpu_custom_call.1} parent=1 // pred_region
      %s752 = ssub.s32 32, 32
      %753 = vsyncadd [#allocation5], %s752
      %s755 = sshll.u32 [#allocation11], 4
      %s756 = int_to_ptr.vmem [resolvable:$true] %s755
      %758 = dma.vmem_to_hbm [thread:$0]  %s756, 32, %s7, [#allocation5]
    $region57: #{tpu_custom_call.1} parent=1 // pred_fallthru
      _
    // Predicated region
    $region58: #{tpu_custom_call.1} parent=1 // pred_check
      _
    $region59: #{tpu_custom_call.1} parent=1 // pred_check_branch
      %760 = sbr.rel (0) target = $region61
    $region60: #{tpu_custom_call.1} parent=1 // pred_region
      %s762 = ssub.s32 32, 32
      %763 = vsyncadd [#allocation13], %s762
      %s765 = sshll.u32 [#allocation12], 4
      %s766 = int_to_ptr.vmem [resolvable:$true] %s765
      %768 = dma.vmem_to_hbm [thread:$0]  %s766, 32, %s8, [#allocation13]
    $region61: #{tpu_custom_call.1} parent=1 // pred_fallthru
      _
    // Predicated region
    $region62: #{tpu_custom_call.1} parent=1 // pred_check
      _
    $region63: #{tpu_custom_call.1} parent=1 // pred_check_branch
      %770 = sbr.rel (0) target = $region65
    $region64: #{tpu_custom_call.1} parent=1 // pred_region
      %s772 = ssub.s32 32, 32
      %773 = vsyncadd [#allocation13], %s772
      %s775 = sshll.u32 [#allocation14], 4
      %s776 = int_to_ptr.vmem [resolvable:$true] %s775
      %778 = dma.vmem_to_hbm [thread:$0]  %s776, 32, %s9, [#allocation13]
    $region65: #{tpu_custom_call.1} parent=1 // pred_fallthru
      _
    // Predicated region
    $region66: #{tpu_custom_call.1} parent=1 // pred_check
      _
    $region67: #{tpu_custom_call.1} parent=1 // pred_check_branch
      %780 = sbr.rel (0) target = $region69
    $region68: #{tpu_custom_call.1} parent=1 // pred_region
      %781 = dma.done [#allocation5], 32
    $region69: #{tpu_custom_call.1} parent=1 // pred_fallthru
      _
    // Predicated region
    $region70: #{tpu_custom_call.1} parent=1 // pred_check
      _
    $region71: #{tpu_custom_call.1} parent=1 // pred_check_branch
      %783 = sbr.rel (0) target = $region73
    $region72: #{tpu_custom_call.1} parent=1 // pred_region
      %784 = dma.done [#allocation13], 32
    $region73: #{tpu_custom_call.1} parent=1 // pred_fallthru
      _
    // Predicated region
    $region74: #{tpu_custom_call.1} parent=1 // pred_check
      _
    $region75: #{tpu_custom_call.1} parent=1 // pred_check_branch
      %786 = sbr.rel (0) target = $region77
    $region76: #{tpu_custom_call.1} parent=1 // pred_region
      %787 = dma.done [#allocation13], 32
    $region77: #{tpu_custom_call.1} parent=1 // pred_fallthru
      _
    %788 = vsyncpa [#allocation4], 1
    %789 = vsyncpa [#allocation7], 1
    %790 = vsyncpa [#allocation10], 1
    %791 = vsyncpa [#allocation5], 1
    %792 = vsyncpa [#allocation13], 1

// kernel: tpu_custom_call.1
$region0: #{tpu_custom_call.1}
  #allocation0 [shape = 'u32[]', space=smem, size = 0x4, offset = 0x4, fixed_abs, tag = 'smem constant byte address 0x4 - core index']
  #allocation1 [shape = 'u32[144,128]{1,0:T(1,128)}', space=vmem, size = 0x12000, scoped, tag = 'internal scratch']
  #allocation2 [shape = 'f32[2,128]{1,0:T(2,128)}', space=vmem, size = 0x400, scoped, tag = 'scratch operand']
  %s0 = inlined_call_operand.hbm [shape: f32[2,1024], index: 0, kind: input, shape index: {}]
  %s1 = inlined_call_operand.hbm [shape: f32[1024,128], index: 1, kind: input, shape index: {}]
  %s2 = inlined_call_operand.vmem [shape: f32[1,128], index: 2, kind: input, shape index: {}]
  %s3 = inlined_call_operand.hbm [shape: f32[128,128], index: 3, kind: input, shape index: {}]
  %s4 = inlined_call_operand.vmem [shape: f32[1,128], index: 4, kind: input, shape index: {}]
  %s5 = inlined_call_operand.hbm [shape: f32[128,128], index: 5, kind: input, shape index: {}]
  %s6 = inlined_call_operand.vmem [shape: f32[1,128], index: 6, kind: input, shape index: {}]
  %s7 = inlined_call_operand.hbm [shape: f32[2,128], index: 7, kind: output, shape index: {0}]
  %s8 = inlined_call_operand.hbm [shape: f32[2,128], index: 8, kind: output, shape index: {1}]
  %s9 = inlined_call_operand.hbm [shape: f32[2,128], index: 9, kind: output, shape index: {2}]
  %10 = xla_tuple %s7, %s8, %s9
  %s11 = sld [smem:[#allocation0]]
  $region78: #{tpu_custom_call.1} parent=0
    _
  %s13 = ssub.s32 1, %s11
  %s14 = scalar_select 0, %s13, %s11
  $region1: #{tpu_custom_call.1} parent=0
    #allocation3 [shape = 'u8[8192]{0}', space=vmem, size = 0x2000, scoped, tag = 'input window, operand 0, single buffered']
    #allocation4 [shape = 's32[1]{0}', space=sflag, size = 0x4, scoped, tag = 'scoped memory for tpu_custom_call.1']
    #allocation5 [shape = 's32[1]{0}', space=sflag, size = 0x4, scoped, tag = 'scoped memory for tpu_custom_call.1']
    #allocation6 [shape = 'u8[524288]{0}', space=vmem, size = 0x80000, scoped, tag = 'input window, operand 1, single buffered']
    #allocation7 [shape = 's32[1]{0}', space=sflag, size = 0x4, scoped, tag = 'scoped memory for tpu_custom_call.1']
    #allocation8 [shape = 'u8[65536]{0}', space=vmem, size = 0x10000, scoped, tag = 'input window, operand 3, single buffered']
    #allocation9 [shape = 'u8[65536]{0}', space=vmem, size = 0x10000, scoped, tag = 'input window, operand 5, single buffered']
    #allocation10 [shape = 's32[1]{0}', space=sflag, size = 0x4, scoped, tag = 'scoped memory for tpu_custom_call.1']
    #allocation11 [shape = 'u8[1024]{0}', space=vmem, size = 0x400, scoped, tag = 'output window, operand 0, single buffered']
    #allocation12 [shape = 'u8[1024]{0}', space=vmem, size = 0x400, scoped, tag = 'output window, operand 1, single buffered']
    #allocation13 [shape = 's32[1]{0}', space=sflag, size = 0x4, scoped, tag = 'scoped memory for tpu_custom_call.1']
    #allocation14 [shape = 'u8[1024]{0}', space=vmem, size = 0x400, scoped, tag = 'output window, operand 2, single buffered']
    %15 = vsyncpa [#allocation4], 0
    %16 = vsyncpa [#allocation7], 0
    %17 = vsyncpa [#allocation10], 0
    %18 = vsyncpa [#allocation5], 0
    %19 = vsyncpa [#allocation13], 0
    // Predicated region
    $region2: #{tpu_custom_call.1} parent=1 // pred_check
      _
    $region3: #{tpu_custom_call.1} parent=1 // pred_check_branch
      %21 = sbr.rel (0) target = $region5
    $region4: #{tpu_custom_call.1} parent=1 // pred_region
      %s23 = ssub.s32 256, 256
      %24 = vsyncadd [#allocation4], %s23
      %s26 = sshll.u32 [#allocation3], 4
      %s27 = int_to_ptr.vmem [resolvable:$true] %s26
      %29 = dma.hbm_to_vmem [thread:$0]  %s0, 256, %s27, [#allocation4]
    $region5: #{tpu_custom_call.1} parent=1 // pred_fallthru
      _
    // Predicated region
    $region6: #{tpu_custom_call.1} parent=1 // pred_check
      _
    $region7: #{tpu_custom_call.1} parent=1 // pred_check_branch
      %31 = sbr.rel (0) target = $region9
    $region8: #{tpu_custom_call.1} parent=1 // pred_region
      %s33 = ssub.s32 16384, 16384
      %34 = vsyncadd [#allocation7], %s33
      %s35 = sshll.u32 [#allocation6], 4
      %s36 = int_to_ptr.vmem [resolvable:$true] %s35
      %41 = dma.hbm_to_vmem [thread:$0]  %s1, 16384, %s36, [#allocation7], 128, 128, 8
    $region9: #{tpu_custom_call.1} parent=1 // pred_fallthru
      _
    // Predicated region
    $region10: #{tpu_custom_call.1} parent=1 // pred_check
      _
    $region11: #{tpu_custom_call.1} parent=1 // pred_check_branch
      %43 = sbr.rel (0) target = $region13
    $region12: #{tpu_custom_call.1} parent=1 // pred_region
      _
    $region13: #{tpu_custom_call.1} parent=1 // pred_fallthru
      _
    // Predicated region
    $region14: #{tpu_custom_call.1} parent=1 // pred_check
      _
    $region15: #{tpu_custom_call.1} parent=1 // pred_check_branch
      %45 = sbr.rel (0) target = $region17
    $region16: #{tpu_custom_call.1} parent=1 // pred_region
      %s47 = ssub.s32 2048, 2048
      %48 = vsyncadd [#allocation7], %s47
      %s49 = sshll.u32 [#allocation8], 4
      %s50 = int_to_ptr.vmem [resolvable:$true] %s49
      %55 = dma.hbm_to_vmem [thread:$0]  %s3, 2048, %s50, [#allocation7], 128, 128, 8
    $region17: #{tpu_custom_call.1} parent=1 // pred_fallthru
      _
    // Predicated region
    $region18: #{tpu_custom_call.1} parent=1 // pred_check
      _
    $region19: #{tpu_custom_call.1} parent=1 // pred_check_branch
      %57 = sbr.rel (0) target = $region21
    $region20: #{tpu_custom_call.1} parent=1 // pred_region
      _
    $region21: #{tpu_custom_call.1} parent=1 // pred_fallthru
      _
    // Predicated region
    $region22: #{tpu_custom_call.1} parent=1 // pred_check
      _
    $region23: #{tpu_custom_call.1} parent=1 // pred_check_branch
      %59 = sbr.rel (0) target = $region25
    $region24: #{tpu_custom_call.1} parent=1 // pred_region
      %s61 = ssub.s32 2048, 2048
      %62 = vsyncadd [#allocation10], %s61
      %s63 = sshll.u32 [#allocation9], 4
      %s64 = int_to_ptr.vmem [resolvable:$true] %s63
      %69 = dma.hbm_to_vmem [thread:$0]  %s5, 2048, %s64, [#allocation10], 128, 128, 8
    $region25: #{tpu_custom_call.1} parent=1 // pred_fallthru
      _
    // Predicated region
    $region26: #{tpu_custom_call.1} parent=1 // pred_check
      _
    $region27: #{tpu_custom_call.1} parent=1 // pred_check_branch
      %71 = sbr.rel (0) target = $region29
    $region28: #{tpu_custom_call.1} parent=1 // pred_region
      _
    $region29: #{tpu_custom_call.1} parent=1 // pred_fallthru
      _
    // Predicated region
    $region30: #{tpu_custom_call.1} parent=1 // pred_check
      _
    $region31: #{tpu_custom_call.1} parent=1 // pred_check_branch
      %73 = sbr.rel (0) target = $region33
    $region32: #{tpu_custom_call.1} parent=1 // pred_region
      %74 = dma.done [#allocation4], 256
    $region33: #{tpu_custom_call.1} parent=1 // pred_fallthru
      _
    // Predicated region
    $region34: #{tpu_custom_call.1} parent=1 // pred_check
      _
    $region35: #{tpu_custom_call.1} parent=1 // pred_check_branch
      %76 = sbr.rel (0) target = $region37
    $region36: #{tpu_custom_call.1} parent=1 // pred_region
      %77 = dma.done [#allocation7], 16384
    $region37: #{tpu_custom_call.1} parent=1 // pred_fallthru
      _
    // Predicated region
    $region38: #{tpu_custom_call.1} parent=1 // pred_check
      _
    $region39: #{tpu_custom_call.1} parent=1 // pred_check_branch
      %79 = sbr.rel (0) target = $region41
    $region40: #{tpu_custom_call.1} parent=1 // pred_region
      %80 = dma.done [#allocation7], 2048
    $region41: #{tpu_custom_call.1} parent=1 // pred_fallthru
      _
    // Predicated region
    $region42: #{tpu_custom_call.1} parent=1 // pred_check
      _
    $region43: #{tpu_custom_call.1} parent=1 // pred_check_branch
      %82 = sbr.rel (0) target = $region45
    $region44: #{tpu_custom_call.1} parent=1 // pred_region
      %83 = dma.done [#allocation10], 2048
    $region45: #{tpu_custom_call.1} parent=1 // pred_fallthru
      _
    %p84 = scmp.eq.s32.totalorder 0, 0
    // Predicated region
    $region46: #{tpu_custom_call.1} parent=1 // pred_check
      %p85 = pneg %p84
    $region47: #{tpu_custom_call.1} parent=1 // pred_check_branch
      %87 = sbr.rel (%p85) target = $region49
    $region48: #{tpu_custom_call.1} parent=1 // pred_region
      %88 = vst [vmem:[#allocation2] sm:$0x3] 0.0
    $region49: #{tpu_custom_call.1} parent=1 // pred_fallthru
      _
    %v89 = vld [vmem:[#allocation3] sm:$0xff]
    %v90 = vld [vmem:[#allocation3 + $0x8] sm:$0xff]
    %v91 = vld [vmem:[#allocation2] sm:$0x3]
    %v92 = vld [vmem:[#allocation6] sm:$0xff]
    %v93 = vld [vmem:[#allocation6 + $0x8] sm:$0xff]
    %v94 = vld [vmem:[#allocation6 + $0x10] sm:$0xff]
    %v95 = vld [vmem:[#allocation6 + $0x18] sm:$0xff]
    %v96 = vld [vmem:[#allocation6 + $0x20] sm:$0xff]
    %v97 = vld [vmem:[#allocation6 + $0x28] sm:$0xff]
    %v98 = vld [vmem:[#allocation6 + $0x30] sm:$0xff]
    %v99 = vld [vmem:[#allocation6 + $0x38] sm:$0xff]
    %v100 = vld [vmem:[#allocation6 + $0x40] sm:$0xff]
    %v101 = vld [vmem:[#allocation6 + $0x48] sm:$0xff]
    %v102 = vld [vmem:[#allocation6 + $0x50] sm:$0xff]
    %v103 = vld [vmem:[#allocation6 + $0x58] sm:$0xff]
    %v104 = vld [vmem:[#allocation6 + $0x60] sm:$0xff]
    %v105 = vld [vmem:[#allocation6 + $0x68] sm:$0xff]
    %v106 = vld [vmem:[#allocation6 + $0x70] sm:$0xff]
    %v107 = vld [vmem:[#allocation6 + $0x78] sm:$0xff]
    %v108 = vld [vmem:[#allocation6 + $0x80] sm:$0xff]
    %v109 = vld [vmem:[#allocation6 + $0x88] sm:$0xff]
    %v110 = vld [vmem:[#allocation6 + $0x90] sm:$0xff]
    %v111 = vld [vmem:[#allocation6 + $0x98] sm:$0xff]
    %v112 = vld [vmem:[#allocation6 + $0xa0] sm:$0xff]
    %v113 = vld [vmem:[#allocation6 + $0xa8] sm:$0xff]
    %v114 = vld [vmem:[#allocation6 + $0xb0] sm:$0xff]
    %v115 = vld [vmem:[#allocation6 + $0xb8] sm:$0xff]
    %v116 = vld [vmem:[#allocation6 + $0xc0] sm:$0xff]
    %v117 = vld [vmem:[#allocation6 + $0xc8] sm:$0xff]
    %v118 = vld [vmem:[#allocation6 + $0xd0] sm:$0xff]
    %v119 = vld [vmem:[#allocation6 + $0xd8] sm:$0xff]
    %v120 = vld [vmem:[#allocation6 + $0xe0] sm:$0xff]
    %v121 = vld [vmem:[#allocation6 + $0xe8] sm:$0xff]
    %v122 = vld [vmem:[#allocation6 + $0xf0] sm:$0xff]
    %v123 = vld [vmem:[#allocation6 + $0xf8] sm:$0xff]
    %v124 = vld [vmem:[#allocation6 + $0x100] sm:$0xff]
    %v125 = vld [vmem:[#allocation6 + $0x108] sm:$0xff]
    %v126 = vld [vmem:[#allocation6 + $0x110] sm:$0xff]
    %v127 = vld [vmem:[#allocation6 + $0x118] sm:$0xff]
    %v128 = vld [vmem:[#allocation6 + $0x120] sm:$0xff]
    %v129 = vld [vmem:[#allocation6 + $0x128] sm:$0xff]
    %v130 = vld [vmem:[#allocation6 + $0x130] sm:$0xff]
    %v131 = vld [vmem:[#allocation6 + $0x138] sm:$0xff]
    %v132 = vld [vmem:[#allocation6 + $0x140] sm:$0xff]
    %v133 = vld [vmem:[#allocation6 + $0x148] sm:$0xff]
    %v134 = vld [vmem:[#allocation6 + $0x150] sm:$0xff]
    %v135 = vld [vmem:[#allocation6 + $0x158] sm:$0xff]
    %v136 = vld [vmem:[#allocation6 + $0x160] sm:$0xff]
    %v137 = vld [vmem:[#allocation6 + $0x168] sm:$0xff]
    %v138 = vld [vmem:[#allocation6 + $0x170] sm:$0xff]
    %v139 = vld [vmem:[#allocation6 + $0x178] sm:$0xff]
    %v140 = vld [vmem:[#allocation6 + $0x180] sm:$0xff]
    %v141 = vld [vmem:[#allocation6 + $0x188] sm:$0xff]
    %v142 = vld [vmem:[#allocation6 + $0x190] sm:$0xff]
    %v143 = vld [vmem:[#allocation6 + $0x198] sm:$0xff]
    %v144 = vld [vmem:[#allocation6 + $0x1a0] sm:$0xff]
    %v145 = vld [vmem:[#allocation6 + $0x1a8] sm:$0xff]
    %v146 = vld [vmem:[#allocation6 + $0x1b0] sm:$0xff]
    %v147 = vld [vmem:[#allocation6 + $0x1b8] sm:$0xff]
    %v148 = vld [vmem:[#allocation6 + $0x1c0] sm:$0xff]
    %v149 = vld [vmem:[#allocation6 + $0x1c8] sm:$0xff]
    %v150 = vld [vmem:[#allocation6 + $0x1d0] sm:$0xff]
    %v151 = vld [vmem:[#allocation6 + $0x1d8] sm:$0xff]
    %v152 = vld [vmem:[#allocation6 + $0x1e0] sm:$0xff]
    %v153 = vld [vmem:[#allocation6 + $0x1e8] sm:$0xff]
    %v154 = vld [vmem:[#allocation6 + $0x1f0] sm:$0xff]
    %v155 = vld [vmem:[#allocation6 + $0x1f8] sm:$0xff]
    %v156 = vld [vmem:[#allocation6 + $0x200] sm:$0xff]
    %v157 = vld [vmem:[#allocation6 + $0x208] sm:$0xff]
    %v158 = vld [vmem:[#allocation6 + $0x210] sm:$0xff]
    %v159 = vld [vmem:[#allocation6 + $0x218] sm:$0xff]
    %v160 = vld [vmem:[#allocation6 + $0x220] sm:$0xff]
    %v161 = vld [vmem:[#allocation6 + $0x228] sm:$0xff]
    %v162 = vld [vmem:[#allocation6 + $0x230] sm:$0xff]
    %v163 = vld [vmem:[#allocation6 + $0x238] sm:$0xff]
    %v164 = vld [vmem:[#allocation6 + $0x240] sm:$0xff]
    %v165 = vld [vmem:[#allocation6 + $0x248] sm:$0xff]
    %v166 = vld [vmem:[#allocation6 + $0x250] sm:$0xff]
    %v167 = vld [vmem:[#allocation6 + $0x258] sm:$0xff]
    %v168 = vld [vmem:[#allocation6 + $0x260] sm:$0xff]
    %v169 = vld [vmem:[#allocation6 + $0x268] sm:$0xff]
    %v170 = vld [vmem:[#allocation6 + $0x270] sm:$0xff]
    %v171 = vld [vmem:[#allocation6 + $0x278] sm:$0xff]
    %v172 = vld [vmem:[#allocation6 + $0x280] sm:$0xff]
    %v173 = vld [vmem:[#allocation6 + $0x288] sm:$0xff]
    %v174 = vld [vmem:[#allocation6 + $0x290] sm:$0xff]
    %v175 = vld [vmem:[#allocation6 + $0x298] sm:$0xff]
    %v176 = vld [vmem:[#allocation6 + $0x2a0] sm:$0xff]
    %v177 = vld [vmem:[#allocation6 + $0x2a8] sm:$0xff]
    %v178 = vld [vmem:[#allocation6 + $0x2b0] sm:$0xff]
    %v179 = vld [vmem:[#allocation6 + $0x2b8] sm:$0xff]
    %v180 = vld [vmem:[#allocation6 + $0x2c0] sm:$0xff]
    %v181 = vld [vmem:[#allocation6 + $0x2c8] sm:$0xff]
    %v182 = vld [vmem:[#allocation6 + $0x2d0] sm:$0xff]
    %v183 = vld [vmem:[#allocation6 + $0x2d8] sm:$0xff]
    %v184 = vld [vmem:[#allocation6 + $0x2e0] sm:$0xff]
    %v185 = vld [vmem:[#allocation6 + $0x2e8] sm:$0xff]
    %v186 = vld [vmem:[#allocation6 + $0x2f0] sm:$0xff]
    %v187 = vld [vmem:[#allocation6 + $0x2f8] sm:$0xff]
    %v188 = vld [vmem:[#allocation6 + $0x300] sm:$0xff]
    %v189 = vld [vmem:[#allocation6 + $0x308] sm:$0xff]
    %v190 = vld [vmem:[#allocation6 + $0x310] sm:$0xff]
    %v191 = vld [vmem:[#allocation6 + $0x318] sm:$0xff]
    %v192 = vld [vmem:[#allocation6 + $0x320] sm:$0xff]
    %v193 = vld [vmem:[#allocation6 + $0x328] sm:$0xff]
    %v194 = vld [vmem:[#allocation6 + $0x330] sm:$0xff]
    %v195 = vld [vmem:[#allocation6 + $0x338] sm:$0xff]
    %v196 = vld [vmem:[#allocation6 + $0x340] sm:$0xff]
    %v197 = vld [vmem:[#allocation6 + $0x348] sm:$0xff]
    %v198 = vld [vmem:[#allocation6 + $0x350] sm:$0xff]
    %v199 = vld [vmem:[#allocation6 + $0x358] sm:$0xff]
    %v200 = vld [vmem:[#allocation6 + $0x360] sm:$0xff]
    %v201 = vld [vmem:[#allocation6 + $0x368] sm:$0xff]
    %v202 = vld [vmem:[#allocation6 + $0x370] sm:$0xff]
    %v203 = vld [vmem:[#allocation6 + $0x378] sm:$0xff]
    %v204 = vld [vmem:[#allocation6 + $0x380] sm:$0xff]
    %v205 = vld [vmem:[#allocation6 + $0x388] sm:$0xff]
    %v206 = vld [vmem:[#allocation6 + $0x390] sm:$0xff]
    %v207 = vld [vmem:[#allocation6 + $0x398] sm:$0xff]
    %v208 = vld [vmem:[#allocation6 + $0x3a0] sm:$0xff]
    %v209 = vld [vmem:[#allocation6 + $0x3a8] sm:$0xff]
    %v210 = vld [vmem:[#allocation6 + $0x3b0] sm:$0xff]
    %v211 = vld [vmem:[#allocation6 + $0x3b8] sm:$0xff]
    %v212 = vld [vmem:[#allocation6 + $0x3c0] sm:$0xff]
    %v213 = vld [vmem:[#allocation6 + $0x3c8] sm:$0xff]
    %v214 = vld [vmem:[#allocation6 + $0x3d0] sm:$0xff]
    %v215 = vld [vmem:[#allocation6 + $0x3d8] sm:$0xff]
    %v216 = vld [vmem:[#allocation6 + $0x3e0] sm:$0xff]
    %v217 = vld [vmem:[#allocation6 + $0x3e8] sm:$0xff]
    %v218 = vld [vmem:[#allocation6 + $0x3f0] sm:$0xff]
    %v219 = vld [vmem:[#allocation6 + $0x3f8] sm:$0xff]
    %v222 = vcombine.high %v89, %v89
    %v224 = vunpack.c.l.s4 1983009808
    %v225 = vunpack.c.0.s8 %v224
    %v226 = vlaneseq
    %v227 = vshrl.u32 %v226, 7
    %v228 = vsub.s32 %v225, %v227
    %v229 = vrot.slane %v89, %v228
    %v231 = vunpack.c.l.s4 1983009808
    %v232 = vunpack.c.0.s8 %v231
    %v233 = vlaneseq
    %v234 = vshrl.u32 %v233, 7
    %v235 = vsub.s32 %v232, %v234
    %v236 = vrot.slane %v222, %v235
    %v237 = vcombine.high %v229, %v229
    %v238 = vcombine.high %v236, %v236
    %v239 = vcombine.high %v90, %v90
    %v241 = vunpack.c.l.s4 1983009808
    %v242 = vunpack.c.0.s8 %v241
    %v243 = vlaneseq
    %v244 = vshrl.u32 %v243, 7
    %v245 = vsub.s32 %v242, %v244
    %v246 = vrot.slane %v90, %v245
    %v248 = vunpack.c.l.s4 1983009808
    %v249 = vunpack.c.0.s8 %v248
    %v250 = vlaneseq
    %v251 = vshrl.u32 %v250, 7
    %v252 = vsub.s32 %v249, %v251
    %v253 = vrot.slane %v239, %v252
    %v254 = vcombine.high %v246, %v246
    %v255 = vcombine.high %v253, %v253
    %264 = vmatprep.subr.mxu0 0.0
    %265 = vmatpush1.msra.mxu0 %v92
    %266 = vmatprep.subr.mxu0 0.0
    %267 = vmatpush1.msra.mxu0 %v93
    %268 = vmatprep.subr.mxu0 0.0
    %269 = vmatpush1.msra.mxu0 %v94
    %270 = vmatprep.subr.mxu0 0.0
    %271 = vmatpush1.msra.mxu0 %v95
    %272 = vmatprep.subr.mxu0 0.0
    %273 = vmatpush1.msra.mxu0 %v96
    %274 = vmatprep.subr.mxu0 0.0
    %275 = vmatpush1.msra.mxu0 %v97
    %276 = vmatprep.subr.mxu0 0.0
    %277 = vmatpush1.msra.mxu0 %v98
    %278 = vmatprep.subr.mxu0 0.0
    %279 = vmatpush1.msra.mxu0 %v99
    %280 = vmatprep.subr.mxu0 0.0
    %281 = vmatpush1.msra.mxu0 %v100
    %282 = vmatprep.subr.mxu0 0.0
    %283 = vmatpush1.msra.mxu0 %v101
    %284 = vmatprep.subr.mxu0 0.0
    %285 = vmatpush1.msra.mxu0 %v102
    %286 = vmatprep.subr.mxu0 0.0
    %287 = vmatpush1.msra.mxu0 %v103
    %288 = vmatprep.subr.mxu0 0.0
    %289 = vmatpush1.msra.mxu0 %v104
    %290 = vmatprep.subr.mxu0 0.0
    %291 = vmatpush1.msra.mxu0 %v105
    %292 = vmatprep.subr.mxu0 0.0
    %293 = vmatpush1.msra.mxu0 %v106
    %294 = vmatprep.subr.mxu0 0.0
    %295 = vmatpush1.msra.mxu0 %v107
    %296 = vmatprep.subr.mxu0 0.0
    %297 = vmatpush1.msra.mxu0 %v108
    %298 = vmatprep.subr.mxu0 0.0
    %299 = vmatpush1.msra.mxu0 %v109
    %300 = vmatprep.subr.mxu0 0.0
    %301 = vmatpush1.msra.mxu0 %v110
    %302 = vmatprep.subr.mxu0 0.0
    %303 = vmatpush1.msra.mxu0 %v111
    %304 = vmatprep.subr.mxu0 0.0
    %305 = vmatpush1.msra.mxu0 %v112
    %306 = vmatprep.subr.mxu0 0.0
    %307 = vmatpush1.msra.mxu0 %v113
    %308 = vmatprep.subr.mxu0 0.0
    %309 = vmatpush1.msra.mxu0 %v114
    %310 = vmatprep.subr.mxu0 0.0
    %311 = vmatpush1.msra.mxu0 %v115
    %312 = vmatprep.subr.mxu0 0.0
    %313 = vmatpush1.msra.mxu0 %v116
    %314 = vmatprep.subr.mxu0 0.0
    %315 = vmatpush1.msra.mxu0 %v117
    %316 = vmatprep.subr.mxu0 0.0
    %317 = vmatpush1.msra.mxu0 %v118
    %318 = vmatprep.subr.mxu0 0.0
    %319 = vmatpush1.msra.mxu0 %v119
    %320 = vmatprep.subr.mxu0 0.0
    %321 = vmatpush1.msra.mxu0 %v120
    %322 = vmatprep.subr.mxu0 0.0
    %323 = vmatpush1.msra.mxu0 %v121
    %324 = vmatprep.subr.mxu0 0.0
    %325 = vmatpush1.msra.mxu0 %v122
    %326 = vmatprep.subr.mxu0 0.0
    %327 = vmatpush1.msra.mxu0 %v123
    %328 = vmatprep.mubr.f32.mxu0 %v237
    %329 = vmatmul.mubr.f32.gmra.mrb[0].mxu0 %v229
    %v330 = vpop.f32.mrb[0].mxu0
    %v331 = vadd.f32 0.0, %v330
    %v332 = vpop.f32.mrb[0].mxu0
    %333 = vdwg.mxu0
    %334 = vmatprep.subr.mxu0 0.0
    %335 = vmatpush1.msra.mxu0 %v124
    %336 = vmatprep.subr.mxu0 0.0
    %337 = vmatpush1.msra.mxu0 %v125
    %338 = vmatprep.subr.mxu0 0.0
    %339 = vmatpush1.msra.mxu0 %v126
    %340 = vmatprep.subr.mxu0 0.0
    %341 = vmatpush1.msra.mxu0 %v127
    %342 = vmatprep.subr.mxu0 0.0
    %343 = vmatpush1.msra.mxu0 %v128
    %344 = vmatprep.subr.mxu0 0.0
    %345 = vmatpush1.msra.mxu0 %v129
    %346 = vmatprep.subr.mxu0 0.0
    %347 = vmatpush1.msra.mxu0 %v130
    %348 = vmatprep.subr.mxu0 0.0
    %349 = vmatpush1.msra.mxu0 %v131
    %350 = vmatprep.subr.mxu0 0.0
    %351 = vmatpush1.msra.mxu0 %v132
    %352 = vmatprep.subr.mxu0 0.0
    %353 = vmatpush1.msra.mxu0 %v133
    %354 = vmatprep.subr.mxu0 0.0
    %355 = vmatpush1.msra.mxu0 %v134
    %356 = vmatprep.subr.mxu0 0.0
    %357 = vmatpush1.msra.mxu0 %v135
    %358 = vmatprep.subr.mxu0 0.0
    %359 = vmatpush1.msra.mxu0 %v136
    %360 = vmatprep.subr.mxu0 0.0
    %361 = vmatpush1.msra.mxu0 %v137
    %362 = vmatprep.subr.mxu0 0.0
    %363 = vmatpush1.msra.mxu0 %v138
    %364 = vmatprep.subr.mxu0 0.0
    %365 = vmatpush1.msra.mxu0 %v139
    %366 = vmatprep.subr.mxu0 0.0
    %367 = vmatpush1.msra.mxu0 %v140
    %368 = vmatprep.subr.mxu0 0.0
    %369 = vmatpush1.msra.mxu0 %v141
    %370 = vmatprep.subr.mxu0 0.0
    %371 = vmatpush1.msra.mxu0 %v142
    %372 = vmatprep.subr.mxu0 0.0
    %373 = vmatpush1.msra.mxu0 %v143
    %374 = vmatprep.subr.mxu0 0.0
    %375 = vmatpush1.msra.mxu0 %v144
    %376 = vmatprep.subr.mxu0 0.0
    %377 = vmatpush1.msra.mxu0 %v145
    %378 = vmatprep.subr.mxu0 0.0
    %379 = vmatpush1.msra.mxu0 %v146
    %380 = vmatprep.subr.mxu0 0.0
    %381 = vmatpush1.msra.mxu0 %v147
    %382 = vmatprep.subr.mxu0 0.0
    %383 = vmatpush1.msra.mxu0 %v148
    %384 = vmatprep.subr.mxu0 0.0
    %385 = vmatpush1.msra.mxu0 %v149
    %386 = vmatprep.subr.mxu0 0.0
    %387 = vmatpush1.msra.mxu0 %v150
    %388 = vmatprep.subr.mxu0 0.0
    %389 = vmatpush1.msra.mxu0 %v151
    %390 = vmatprep.subr.mxu0 0.0
    %391 = vmatpush1.msra.mxu0 %v152
    %392 = vmatprep.subr.mxu0 0.0
    %393 = vmatpush1.msra.mxu0 %v153
    %394 = vmatprep.subr.mxu0 0.0
    %395 = vmatpush1.msra.mxu0 %v154
    %396 = vmatprep.subr.mxu0 0.0
    %397 = vmatpush1.msra.mxu0 %v155
    %398 = vmatprep.mubr.f32.mxu0 %v238
    %399 = vmatmul.mubr.f32.gmra.mrb[0].mxu0 %v236
    %v400 = vpop.f32.mrb[0].mxu0
    %v401 = vadd.f32 %v331, %v400
    %v402 = vpop.f32.mrb[0].mxu0
    %403 = vdwg.mxu0
    %404 = vmatprep.subr.mxu0 0.0
    %405 = vmatpush1.msra.mxu0 %v156
    %406 = vmatprep.subr.mxu0 0.0
    %407 = vmatpush1.msra.mxu0 %v157
    %408 = vmatprep.subr.mxu0 0.0
    %409 = vmatpush1.msra.mxu0 %v158
    %410 = vmatprep.subr.mxu0 0.0
    %411 = vmatpush1.msra.mxu0 %v159
    %412 = vmatprep.subr.mxu0 0.0
    %413 = vmatpush1.msra.mxu0 %v160
    %414 = vmatprep.subr.mxu0 0.0
    %415 = vmatpush1.msra.mxu0 %v161
    %416 = vmatprep.subr.mxu0 0.0
    %417 = vmatpush1.msra.mxu0 %v162
    %418 = vmatprep.subr.mxu0 0.0
    %419 = vmatpush1.msra.mxu0 %v163
    %420 = vmatprep.subr.mxu0 0.0
    %421 = vmatpush1.msra.mxu0 %v164
    %422 = vmatprep.subr.mxu0 0.0
    %423 = vmatpush1.msra.mxu0 %v165
    %424 = vmatprep.subr.mxu0 0.0
    %425 = vmatpush1.msra.mxu0 %v166
    %426 = vmatprep.subr.mxu0 0.0
    %427 = vmatpush1.msra.mxu0 %v167
    %428 = vmatprep.subr.mxu0 0.0
    %429 = vmatpush1.msra.mxu0 %v168
    %430 = vmatprep.subr.mxu0 0.0
    %431 = vmatpush1.msra.mxu0 %v169
    %432 = vmatprep.subr.mxu0 0.0
    %433 = vmatpush1.msra.mxu0 %v170
    %434 = vmatprep.subr.mxu0 0.0
    %435 = vmatpush1.msra.mxu0 %v171
    %436 = vmatprep.subr.mxu0 0.0
    %437 = vmatpush1.msra.mxu0 %v172
    %438 = vmatprep.subr.mxu0 0.0
    %439 = vmatpush1.msra.mxu0 %v173
    %440 = vmatprep.subr.mxu0 0.0
    %441 = vmatpush1.msra.mxu0 %v174
    %442 = vmatprep.subr.mxu0 0.0
    %443 = vmatpush1.msra.mxu0 %v175
    %444 = vmatprep.subr.mxu0 0.0
    %445 = vmatpush1.msra.mxu0 %v176
    %446 = vmatprep.subr.mxu0 0.0
    %447 = vmatpush1.msra.mxu0 %v177
    %448 = vmatprep.subr.mxu0 0.0
    %449 = vmatpush1.msra.mxu0 %v178
    %450 = vmatprep.subr.mxu0 0.0
    %451 = vmatpush1.msra.mxu0 %v179
    %452 = vmatprep.subr.mxu0 0.0
    %453 = vmatpush1.msra.mxu0 %v180
    %454 = vmatprep.subr.mxu0 0.0
    %455 = vmatpush1.msra.mxu0 %v181
    %456 = vmatprep.subr.mxu0 0.0
    %457 = vmatpush1.msra.mxu0 %v182
    %458 = vmatprep.subr.mxu0 0.0
    %459 = vmatpush1.msra.mxu0 %v183
    %460 = vmatprep.subr.mxu0 0.0
    %461 = vmatpush1.msra.mxu0 %v184
    %462 = vmatprep.subr.mxu0 0.0
    %463 = vmatpush1.msra.mxu0 %v185
    %464 = vmatprep.subr.mxu0 0.0
    %465 = vmatpush1.msra.mxu0 %v186
    %466 = vmatprep.subr.mxu0 0.0
    %467 = vmatpush1.msra.mxu0 %v187
    %468 = vmatprep.mubr.f32.mxu0 %v254
    %469 = vmatmul.mubr.f32.gmra.mrb[0].mxu0 %v246
    %v470 = vpop.f32.mrb[0].mxu0
    %v471 = vadd.f32 %v401, %v470
    %v472 = vpop.f32.mrb[0].mxu0
    %473 = vdwg.mxu0
    %474 = vmatprep.subr.mxu0 0.0
    %475 = vmatpush1.msra.mxu0 %v188
    %476 = vmatprep.subr.mxu0 0.0
    %477 = vmatpush1.msra.mxu0 %v189
    %478 = vmatprep.subr.mxu0 0.0
    %479 = vmatpush1.msra.mxu0 %v190
    %480 = vmatprep.subr.mxu0 0.0
    %481 = vmatpush1.msra.mxu0 %v191
    %482 = vmatprep.subr.mxu0 0.0
    %483 = vmatpush1.msra.mxu0 %v192
    %484 = vmatprep.subr.mxu0 0.0
    %485 = vmatpush1.msra.mxu0 %v193
    %486 = vmatprep.subr.mxu0 0.0
    %487 = vmatpush1.msra.mxu0 %v194
    %488 = vmatprep.subr.mxu0 0.0
    %489 = vmatpush1.msra.mxu0 %v195
    %490 = vmatprep.subr.mxu0 0.0
    %491 = vmatpush1.msra.mxu0 %v196
    %492 = vmatprep.subr.mxu0 0.0
    %493 = vmatpush1.msra.mxu0 %v197
    %494 = vmatprep.subr.mxu0 0.0
    %495 = vmatpush1.msra.mxu0 %v198
    %496 = vmatprep.subr.mxu0 0.0
    %497 = vmatpush1.msra.mxu0 %v199
    %498 = vmatprep.subr.mxu0 0.0
    %499 = vmatpush1.msra.mxu0 %v200
    %500 = vmatprep.subr.mxu0 0.0
    %501 = vmatpush1.msra.mxu0 %v201
    %502 = vmatprep.subr.mxu0 0.0
    %503 = vmatpush1.msra.mxu0 %v202
    %504 = vmatprep.subr.mxu0 0.0
    %505 = vmatpush1.msra.mxu0 %v203
    %506 = vmatprep.subr.mxu0 0.0
    %507 = vmatpush1.msra.mxu0 %v204
    %508 = vmatprep.subr.mxu0 0.0
    %509 = vmatpush1.msra.mxu0 %v205
    %510 = vmatprep.subr.mxu0 0.0
    %511 = vmatpush1.msra.mxu0 %v206
    %512 = vmatprep.subr.mxu0 0.0
    %513 = vmatpush1.msra.mxu0 %v207
    %514 = vmatprep.subr.mxu0 0.0
    %515 = vmatpush1.msra.mxu0 %v208
    %516 = vmatprep.subr.mxu0 0.0
    %517 = vmatpush1.msra.mxu0 %v209
    %518 = vmatprep.subr.mxu0 0.0
    %519 = vmatpush1.msra.mxu0 %v210
    %520 = vmatprep.subr.mxu0 0.0
    %521 = vmatpush1.msra.mxu0 %v211
    %522 = vmatprep.subr.mxu0 0.0
    %523 = vmatpush1.msra.mxu0 %v212
    %524 = vmatprep.subr.mxu0 0.0
    %525 = vmatpush1.msra.mxu0 %v213
    %526 = vmatprep.subr.mxu0 0.0
    %527 = vmatpush1.msra.mxu0 %v214
    %528 = vmatprep.subr.mxu0 0.0
    %529 = vmatpush1.msra.mxu0 %v215
    %530 = vmatprep.subr.mxu0 0.0
    %531 = vmatpush1.msra.mxu0 %v216
    %532 = vmatprep.subr.mxu0 0.0
    %533 = vmatpush1.msra.mxu0 %v217
    %534 = vmatprep.subr.mxu0 0.0
    %535 = vmatpush1.msra.mxu0 %v218
    %536 = vmatprep.subr.mxu0 0.0
    %537 = vmatpush1.msra.mxu0 %v219
    %538 = vmatprep.mubr.f32.mxu0 %v255
    %539 = vmatmul.mubr.f32.gmra.mrb[0].mxu0 %v253
    %v540 = vpop.f32.mrb[0].mxu0
    %v541 = vadd.f32 %v471, %v540
    %v542 = vpop.f32.mrb[0].mxu0
    %543 = vdwg.mxu0
    %v544 = vadd.f32 %v91, %v541
    %545 = vst [vmem:[#allocation2] sm:$0x3] %v544
    // Predicated region
    $region50: #{tpu_custom_call.1} parent=1 // pred_check
      %p546 = pneg %p84
    $region51: #{tpu_custom_call.1} parent=1 // pred_check_branch
      %548 = sbr.rel (%p546) target = $region53
    $region52: #{tpu_custom_call.1} parent=1 // pred_region
      %v549 = vld [vmem:[#allocation2] sm:$0x3]
      %v550 = vld [vmem:[%s2] sm:$0x1]
      %v552 = vlaneseq
      %v553 = vshrl.u32 %v552, 7
      %v554 = vsub.s32 0, %v553
      %v555 = vrot.slane %v550, %v554
      %v557 = vadd.f32 %v549, %v555
      %v558 = vmax.f32 %v557, 0.0
      %559 = vst [vmem:[#allocation11] sm:$0x3] %v558
      %v560 = vld [vmem:[#allocation8] sm:$0xff]
      %v561 = vld [vmem:[#allocation8 + $0x8] sm:$0xff]
      %v562 = vld [vmem:[#allocation8 + $0x10] sm:$0xff]
      %v563 = vld [vmem:[#allocation8 + $0x18] sm:$0xff]
      %v564 = vld [vmem:[#allocation8 + $0x20] sm:$0xff]
      %v565 = vld [vmem:[#allocation8 + $0x28] sm:$0xff]
      %v566 = vld [vmem:[#allocation8 + $0x30] sm:$0xff]
      %v567 = vld [vmem:[#allocation8 + $0x38] sm:$0xff]
      %v568 = vld [vmem:[#allocation8 + $0x40] sm:$0xff]
      %v569 = vld [vmem:[#allocation8 + $0x48] sm:$0xff]
      %v570 = vld [vmem:[#allocation8 + $0x50] sm:$0xff]
      %v571 = vld [vmem:[#allocation8 + $0x58] sm:$0xff]
      %v572 = vld [vmem:[#allocation8 + $0x60] sm:$0xff]
      %v573 = vld [vmem:[#allocation8 + $0x68] sm:$0xff]
      %v574 = vld [vmem:[#allocation8 + $0x70] sm:$0xff]
      %v575 = vld [vmem:[#allocation8 + $0x78] sm:$0xff]
      %v576 = vld [vmem:[%s4] sm:$0x1]
      %v578 = vlaneseq
      %v579 = vshrl.u32 %v578, 7
      %v580 = vsub.s32 0, %v579
      %v581 = vrot.slane %v576, %v580
      %583 = vmatprep.subr.mxu0 0.0
      %584 = vmatpush1.msra.mxu0 %v560
      %585 = vmatprep.subr.mxu0 0.0
      %586 = vmatpush1.msra.mxu0 %v561
      %587 = vmatprep.subr.mxu0 0.0
      %588 = vmatpush1.msra.mxu0 %v562
      %589 = vmatprep.subr.mxu0 0.0
      %590 = vmatpush1.msra.mxu0 %v563
      %591 = vmatprep.subr.mxu0 0.0
      %592 = vmatpush1.msra.mxu0 %v564
      %593 = vmatprep.subr.mxu0 0.0
      %594 = vmatpush1.msra.mxu0 %v565
      %595 = vmatprep.subr.mxu0 0.0
      %596 = vmatpush1.msra.mxu0 %v566
      %597 = vmatprep.subr.mxu0 0.0
      %598 = vmatpush1.msra.mxu0 %v567
      %599 = vmatprep.subr.mxu0 0.0
      %600 = vmatpush1.msra.mxu0 %v568
      %601 = vmatprep.subr.mxu0 0.0
      %602 = vmatpush1.msra.mxu0 %v569
      %603 = vmatprep.subr.mxu0 0.0
      %604 = vmatpush1.msra.mxu0 %v570
      %605 = vmatprep.subr.mxu0 0.0
      %606 = vmatpush1.msra.mxu0 %v571
      %607 = vmatprep.subr.mxu0 0.0
      %608 = vmatpush1.msra.mxu0 %v572
      %609 = vmatprep.subr.mxu0 0.0
      %610 = vmatpush1.msra.mxu0 %v573
      %611 = vmatprep.subr.mxu0 0.0
      %612 = vmatpush1.msra.mxu0 %v574
      %613 = vmatprep.subr.mxu0 0.0
      %614 = vmatpush1.msra.mxu0 %v575
      %615 = vmatprep.subr.mxu0 0.0
      %616 = vmatpush1.msra.mxu0 0.0
      %617 = vmatprep.subr.mxu0 0.0
      %618 = vmatpush1.msra.mxu0 0.0
      %619 = vmatprep.subr.mxu0 0.0
      %620 = vmatpush1.msra.mxu0 0.0
      %621 = vmatprep.subr.mxu0 0.0
      %622 = vmatpush1.msra.mxu0 0.0
      %623 = vmatprep.subr.mxu0 0.0
      %624 = vmatpush1.msra.mxu0 0.0
      %625 = vmatprep.subr.mxu0 0.0
      %626 = vmatpush1.msra.mxu0 0.0
      %627 = vmatprep.subr.mxu0 0.0
      %628 = vmatpush1.msra.mxu0 0.0
      %629 = vmatprep.subr.mxu0 0.0
      %630 = vmatpush1.msra.mxu0 0.0
      %631 = vmatprep.subr.mxu0 0.0
      %632 = vmatpush1.msra.mxu0 0.0
      %633 = vmatprep.subr.mxu0 0.0
      %634 = vmatpush1.msra.mxu0 0.0
      %635 = vmatprep.subr.mxu0 0.0
      %636 = vmatpush1.msra.mxu0 0.0
      %637 = vmatprep.subr.mxu0 0.0
      %638 = vmatpush1.msra.mxu0 0.0
      %639 = vmatprep.subr.mxu0 0.0
      %640 = vmatpush1.msra.mxu0 0.0
      %641 = vmatprep.subr.mxu0 0.0
      %642 = vmatpush1.msra.mxu0 0.0
      %643 = vmatprep.subr.mxu0 0.0
      %644 = vmatpush1.msra.mxu0 0.0
      %645 = vmatprep.subr.mxu0 0.0
      %646 = vmatpush1.msra.mxu0 0.0
      %647 = vmatprep.mubr.f32.mxu0 0.0
      %648 = vmatmul.mubr.f32.gmra.mrb[0].mxu0 %v558
      %v649 = vpop.f32.mrb[0].mxu0
      %v650 = vadd.f32 %v581, %v649
      %v651 = vpop.f32.mrb[0].mxu0
      %652 = vdwg.mxu0
      %v653 = vmax.f32 %v650, 0.0
      %654 = vst [vmem:[#allocation12] sm:$0x3] %v653
      %v655 = vld [vmem:[#allocation9] sm:$0xff]
      %v656 = vld [vmem:[#allocation9 + $0x8] sm:$0xff]
      %v657 = vld [vmem:[#allocation9 + $0x10] sm:$0xff]
      %v658 = vld [vmem:[#allocation9 + $0x18] sm:$0xff]
      %v659 = vld [vmem:[#allocation9 + $0x20] sm:$0xff]
      %v660 = vld [vmem:[#allocation9 + $0x28] sm:$0xff]
      %v661 = vld [vmem:[#allocation9 + $0x30] sm:$0xff]
      %v662 = vld [vmem:[#allocation9 + $0x38] sm:$0xff]
      %v663 = vld [vmem:[#allocation9 + $0x40] sm:$0xff]
      %v664 = vld [vmem:[#allocation9 + $0x48] sm:$0xff]
      %v665 = vld [vmem:[#allocation9 + $0x50] sm:$0xff]
      %v666 = vld [vmem:[#allocation9 + $0x58] sm:$0xff]
      %v667 = vld [vmem:[#allocation9 + $0x60] sm:$0xff]
      %v668 = vld [vmem:[#allocation9 + $0x68] sm:$0xff]
      %v669 = vld [vmem:[#allocation9 + $0x70] sm:$0xff]
      %v670 = vld [vmem:[#allocation9 + $0x78] sm:$0xff]
      %v671 = vld [vmem:[%s6] sm:$0x1]
      %v673 = vlaneseq
      %v674 = vshrl.u32 %v673, 7
      %v675 = vsub.s32 0, %v674
      %v676 = vrot.slane %v671, %v675
      %678 = vmatprep.subr.mxu0 0.0
      %679 = vmatpush1.msra.mxu0 %v655
      %680 = vmatprep.subr.mxu0 0.0
      %681 = vmatpush1.msra.mxu0 %v656
      %682 = vmatprep.subr.mxu0 0.0
      %683 = vmatpush1.msra.mxu0 %v657
      %684 = vmatprep.subr.mxu0 0.0
      %685 = vmatpush1.msra.mxu0 %v658
      %686 = vmatprep.subr.mxu0 0.0
      %687 = vmatpush1.msra.mxu0 %v659
      %688 = vmatprep.subr.mxu0 0.0
      %689 = vmatpush1.msra.mxu0 %v660
      %690 = vmatprep.subr.mxu0 0.0
      %691 = vmatpush1.msra.mxu0 %v661
      %692 = vmatprep.subr.mxu0 0.0
      %693 = vmatpush1.msra.mxu0 %v662
      %694 = vmatprep.subr.mxu0 0.0
      %695 = vmatpush1.msra.mxu0 %v663
      %696 = vmatprep.subr.mxu0 0.0
      %697 = vmatpush1.msra.mxu0 %v664
      %698 = vmatprep.subr.mxu0 0.0
      %699 = vmatpush1.msra.mxu0 %v665
      %700 = vmatprep.subr.mxu0 0.0
      %701 = vmatpush1.msra.mxu0 %v666
      %702 = vmatprep.subr.mxu0 0.0
      %703 = vmatpush1.msra.mxu0 %v667
      %704 = vmatprep.subr.mxu0 0.0
      %705 = vmatpush1.msra.mxu0 %v668
      %706 = vmatprep.subr.mxu0 0.0
      %707 = vmatpush1.msra.mxu0 %v669
      %708 = vmatprep.subr.mxu0 0.0
      %709 = vmatpush1.msra.mxu0 %v670
      %710 = vmatprep.subr.mxu0 0.0
      %711 = vmatpush1.msra.mxu0 0.0
      %712 = vmatprep.subr.mxu0 0.0
      %713 = vmatpush1.msra.mxu0 0.0
      %714 = vmatprep.subr.mxu0 0.0
      %715 = vmatpush1.msra.mxu0 0.0
      %716 = vmatprep.subr.mxu0 0.0
      %717 = vmatpush1.msra.mxu0 0.0
      %718 = vmatprep.subr.mxu0 0.0
      %719 = vmatpush1.msra.mxu0 0.0
      %720 = vmatprep.subr.mxu0 0.0
      %721 = vmatpush1.msra.mxu0 0.0
      %722 = vmatprep.subr.mxu0 0.0
      %723 = vmatpush1.msra.mxu0 0.0
      %724 = vmatprep.subr.mxu0 0.0
      %725 = vmatpush1.msra.mxu0 0.0
      %726 = vmatprep.subr.mxu0 0.0
      %727 = vmatpush1.msra.mxu0 0.0
      %728 = vmatprep.subr.mxu0 0.0
      %729 = vmatpush1.msra.mxu0 0.0
      %730 = vmatprep.subr.mxu0 0.0
      %731 = vmatpush1.msra.mxu0 0.0
      %732 = vmatprep.subr.mxu0 0.0
      %733 = vmatpush1.msra.mxu0 0.0
      %734 = vmatprep.subr.mxu0 0.0
      %735 = vmatpush1.msra.mxu0 0.0
      %736 = vmatprep.subr.mxu0 0.0
      %737 = vmatpush1.msra.mxu0 0.0
      %738 = vmatprep.subr.mxu0 0.0
      %739 = vmatpush1.msra.mxu0 0.0
      %740 = vmatprep.subr.mxu0 0.0
      %741 = vmatpush1.msra.mxu0 0.0
      %742 = vmatprep.mubr.f32.mxu0 0.0
      %743 = vmatmul.mubr.f32.gmra.mrb[0].mxu0 %v653
      %v744 = vpop.f32.mrb[0].mxu0
      %v745 = vadd.f32 %v676, %v744
      %v746 = vpop.f32.mrb[0].mxu0
      %747 = vdwg.mxu0
      %748 = vst [vmem:[#allocation14] sm:$0x3] %v745
    $region53: #{tpu_custom_call.1} parent=1 // pred_fallthru
      _
    // Predicated region
    $region54: #{tpu_custom_call.1} parent=1 // pred_check
      _
    $region55: #{tpu_custom_call.1} parent=1 // pred_check_branch
      %750 = sbr.rel (0) target = $region57
    $region56: #{tpu_custom_call.1} parent=1 // pred_region
      %s752 = ssub.s32 32, 32
      %753 = vsyncadd [#allocation5], %s752
      %s755 = sshll.u32 [#allocation11], 4
      %s756 = int_to_ptr.vmem [resolvable:$true] %s755
      %758 = dma.vmem_to_hbm [thread:$0]  %s756, 32, %s7, [#allocation5]
    $region57: #{tpu_custom_call.1} parent=1 // pred_fallthru
      _
    // Predicated region
    $region58: #{tpu_custom_call.1} parent=1 // pred_check
      _
    $region59: #{tpu_custom_call.1} parent=1 // pred_check_branch
      %760 = sbr.rel (0) target = $region61
    $region60: #{tpu_custom_call.1} parent=1 // pred_region
      %s762 = ssub.s32 32, 32
      %763 = vsyncadd [#allocation13], %s762
      %s765 = sshll.u32 [#allocation12], 4
      %s766 = int_to_ptr.vmem [resolvable:$true] %s765
      %768 = dma.vmem_to_hbm [thread:$0]  %s766, 32, %s8, [#allocation13]
    $region61: #{tpu_custom_call.1} parent=1 // pred_fallthru
      _
    // Predicated region
    $region62: #{tpu_custom_call.1} parent=1 // pred_check
      _
    $region63: #{tpu_custom_call.1} parent=1 // pred_check_branch
      %770 = sbr.rel (0) target = $region65
    $region64: #{tpu_custom_call.1} parent=1 // pred_region
      %s772 = ssub.s32 32, 32
      %773 = vsyncadd [#allocation13], %s772
      %s775 = sshll.u32 [#allocation14], 4
      %s776 = int_to_ptr.vmem [resolvable:$true] %s775
      %778 = dma.vmem_to_hbm [thread:$0]  %s776, 32, %s9, [#allocation13]
    $region65: #{tpu_custom_call.1} parent=1 // pred_fallthru
      _
    // Predicated region
    $region66: #{tpu_custom_call.1} parent=1 // pred_check
      _
    $region67: #{tpu_custom_call.1} parent=1 // pred_check_branch
      %780 = sbr.rel (0) target = $region69
    $region68: #{tpu_custom_call.1} parent=1 // pred_region
      %781 = dma.done [#allocation5], 32
    $region69: #{tpu_custom_call.1} parent=1 // pred_fallthru
      _
    // Predicated region
    $region70: #{tpu_custom_call.1} parent=1 // pred_check
      _
    $region71: #{tpu_custom_call.1} parent=1 // pred_check_branch
      %783 = sbr.rel (0) target = $region73
    $region72: #{tpu_custom_call.1} parent=1 // pred_region
      %784 = dma.done [#allocation13], 32
    $region73: #{tpu_custom_call.1} parent=1 // pred_fallthru
      _
    // Predicated region
    $region74: #{tpu_custom_call.1} parent=1 // pred_check
      _
    $region75: #{tpu_custom_call.1} parent=1 // pred_check_branch
      %786 = sbr.rel (0) target = $region77
    $region76: #{tpu_custom_call.1} parent=1 // pred_region
      %787 = dma.done [#allocation13], 32
    $region77: #{tpu_custom_call.1} parent=1 // pred_fallthru
      _
    %788 = vsyncpa [#allocation4], 1
    %789 = vsyncpa [#allocation7], 1
    %790 = vsyncpa [#allocation10], 1
    %791 = vsyncpa [#allocation5], 1
    %792 = vsyncpa [#allocation13], 1

</llo_original>
